<compile_context>
chip_gen: v7x
topology: tpu7x:2x2x1
jax: 0.10.0
libtpu: 0.0.40
codegen_flags: <defaults>
</compile_context>

<pallas_src>
import functools
import math

import numpy as np
import jax
import jax.numpy as jnp
from jax import lax
from jax.experimental import pallas as pl
from jax.experimental.pallas import tpu as pltpu

_SQRT2 = math.sqrt(2.0)


def _round_up(x, m):
    return ((x + m - 1) // m) * m


def make_kernel(k):
    k = np.asarray(k, dtype=np.float32)
    if k.ndim == 1:
        k = k[None, :] * k[:, None]
    k = k / k.sum()
    return k


# ---------------------------------------------------------------------------
# Pallas kernel 1: tiled matmul, fused bias + FusedLeakyReLU + residual add.
# ---------------------------------------------------------------------------
def _matmul_kernel(a_ref, b_ref, bias_ref, *rest, activate, neg_slope,
                   act_scale, has_residual, res_scale):
    if has_residual:
        res_ref, o_ref, acc_ref = rest
    else:
        o_ref, acc_ref = rest
        res_ref = None

    @pl.when(pl.program_id(2) == 0)
    def _():
        acc_ref[...] = jnp.zeros_like(acc_ref)

    acc_ref[...] += jnp.dot(a_ref[...], b_ref[...],
                            preferred_element_type=jnp.float32)

    @pl.when(pl.program_id(2) == pl.num_programs(2) - 1)
    def _():
        out = acc_ref[...] + bias_ref[...]
        if activate:
            out = jnp.where(out >= 0.0, out, out * neg_slope) * act_scale
        if res_ref is not None:
            out = (out + res_ref[...]) * res_scale
        o_ref[...] = out.astype(o_ref.dtype)


def pallas_matmul(a, b, bias=None, *, activate=False, residual=None,
                  res_scale=1.0, neg_slope=0.2, act_scale=_SQRT2):
    """out = [act(a @ b + bias) (+res)*res_scale], a:(M,K), b:(K,N), bias:(N,)."""
    M, K = a.shape
    Kb, N = b.shape
    assert K == Kb
    if bias is None:
        bias = jnp.zeros((N,), jnp.float32)

    tm = 128 if M >= 128 else _round_up(max(M, 1), 8)
    Np = _round_up(N, 128)
    tn = next(t for t in (512, 256, 128) if Np % t == 0)   # lane-dense output
    tk = min(512, _round_up(K, 128))                       # no gross K padding
    Mp = _round_up(M, tm)
    Kp = _round_up(K, tk)

    a_p = jnp.pad(a.astype(jnp.float32), ((0, Mp - M), (0, Kp - K)))
    b_p = jnp.pad(b.astype(jnp.float32), ((0, Kp - K), (0, Np - N)))
    bias_p = jnp.pad(bias.astype(jnp.float32), (0, Np - N))[None, :]

    in_specs = [
        pl.BlockSpec((tm, tk), lambda i, j, k: (i, k)),
        pl.BlockSpec((tk, tn), lambda i, j, k: (k, j)),
        pl.BlockSpec((1, tn), lambda i, j, k: (0, j)),
    ]
    args = [a_p, b_p, bias_p]
    has_residual = residual is not None
    if has_residual:
        r_p = jnp.pad(residual.astype(jnp.float32),
                      ((0, Mp - M), (0, Np - N)))
        in_specs.append(pl.BlockSpec((tm, tn), lambda i, j, k: (i, j)))
        args.append(r_p)

    grid = (Mp // tm, Np // tn, Kp // tk)
    kern = functools.partial(_matmul_kernel, activate=activate,
                             neg_slope=neg_slope, act_scale=act_scale,
                             has_residual=has_residual, res_scale=res_scale)
    out = pl.pallas_call(
        kern,
        out_shape=jax.ShapeDtypeStruct((Mp, Np), jnp.float32),
        grid_spec=pltpu.PrefetchScalarGridSpec(
            num_scalar_prefetch=0,
            grid=grid,
            in_specs=in_specs,
            out_specs=pl.BlockSpec((tm, tn), lambda i, j, k: (i, j)),
            scratch_shapes=[pltpu.VMEM((tm, tn), jnp.float32)],
        ),
        compiler_params=pltpu.CompilerParams(
            dimension_semantics=("parallel", "parallel", "arbitrary")),
    )(*args)
    return out[:M, :N]


# ---------------------------------------------------------------------------
# Pallas kernel 2: StyleGAN2 Blur (upfirdn2d, up=down=1), NHWC / lane-dense.
# ---------------------------------------------------------------------------
def _fir_factors(wf):
    """Return (col, row) with wf == outer(col, row), or None if not rank-1."""
    k = np.ascontiguousarray(np.asarray(wf, np.float32))
    if k.ndim != 2 or min(k.shape) < 1:
        return None
    u, s, vt = np.linalg.svd(k)
    if s.size > 1 and s[1] > 1e-6 * max(float(s[0]), 1e-20):
        return None
    col = (u[:, 0] * np.sqrt(s[0])).astype(np.float32)
    row = (vt[0, :] * np.sqrt(s[0])).astype(np.float32)
    return col, row


def _blur_sep_kernel(x_ref, o_ref, tmp_ref, *, taps_x, taps_y):
    # x_ref: (1, Hp, Wp, C); tmp_ref: (Hp, Wo, C); o_ref: (1, Ho, Wo, C).
    _, Ho, Wo, C = o_ref.shape
    # Horizontal FIR pass over every padded row (static unroll, lane-dense).
    acc = None
    for kx, w in enumerate(taps_x):
        v = x_ref[0, :, kx:kx + Wo, :] * w
        acc = v if acc is None else acc + v
    tmp_ref[...] = acc
    # Vertical FIR pass: slices along the tile-major H axis are free.
    out = None
    for ky, w in enumerate(taps_y):
        v = tmp_ref[ky:ky + Ho, :, :] * w
        out = v if out is None else out + v
    o_ref[0] = out


def _blur2d_kernel(x_ref, o_ref, *, taps):
    # Fallback for non-separable FIR kernels: direct shifted FMA accumulation.
    _, Ho, Wo, C = o_ref.shape
    acc = None
    for ky, row in enumerate(taps):
        for kx, w in enumerate(row):
            if w == 0.0:
                continue
            v = x_ref[0, ky:ky + Ho, kx:kx + Wo, :] * w
            acc = v if acc is None else acc + v
    o_ref[0] = acc


def pallas_blur(x, fir_kernel, pad):
    """upfirdn2d(x, fir, up=1, down=1, pad=pad) on NHWC input."""
    # TODO(synk): whole image x all channels per grid step; tile spatially for
    # very large resolutions (>~256^2 at wide C) to stay inside VMEM.
    N, H, W, C = x.shape
    pad0, pad1 = pad
    fir = np.asarray(fir_kernel, np.float32)
    kH, kW = fir.shape
    xp = jnp.pad(x.astype(jnp.float32),
                 ((0, 0), (pad0, pad1), (pad0, pad1), (0, 0)))
    Hp, Wp = H + pad0 + pad1, W + pad0 + pad1
    Ho, Wo = Hp - kH + 1, Wp - kW + 1
    # upfirdn2d correlates with the flipped FIR kernel (F.conv2d(flip(k))).
    wf = fir[::-1, ::-1]

    factors = _fir_factors(wf)
    if factors is not None:
        col, row = factors
        kern = functools.partial(_blur_sep_kernel,
                                 taps_x=tuple(float(v) for v in row),
                                 taps_y=tuple(float(v) for v in col))
        scratch = [pltpu.VMEM((Hp, Wo, C), jnp.float32)]
    else:
        taps = tuple(tuple(float(v) for v in r) for r in wf)
        kern = functools.partial(_blur2d_kernel, taps=taps)
        scratch = []

    return pl.pallas_call(
        kern,
        out_shape=jax.ShapeDtypeStruct((N, Ho, Wo, C), jnp.float32),
        grid_spec=pltpu.PrefetchScalarGridSpec(
            num_scalar_prefetch=0,
            grid=(N,),
            in_specs=[pl.BlockSpec((1, Hp, Wp, C), lambda n: (n, 0, 0, 0))],
            out_specs=pl.BlockSpec((1, Ho, Wo, C), lambda n: (n, 0, 0, 0)),
            scratch_shapes=scratch,
        ),
        compiler_params=pltpu.CompilerParams(
            dimension_semantics=("parallel",)),
    )(xp)


# ---------------------------------------------------------------------------
# Layer wrappers (NHWC activations; im2col + Pallas matmul for the convs).
# ---------------------------------------------------------------------------
def _extract_patches(x, k, stride):
    N, H, W, C = x.shape
    Ho = (H - k) // stride + 1
    Wo = (W - k) // stride + 1
    if k == 1:
        p = x[:, ::stride, ::stride, :]
        return p.reshape(N * Ho * Wo, C), (N, Ho, Wo)
    cols = []
    for dy in range(k):
        for dx in range(k):
            cols.append(x[:, dy:dy + stride * (Ho - 1) + 1:stride,
                          dx:dx + stride * (Wo - 1) + 1:stride, :])
    p = jnp.stack(cols, axis=3)                      # (N, Ho, Wo, k*k, C)
    return p.reshape(N * Ho * Wo, k * k * C), (N, Ho, Wo)


def conv_layer_forward(p, x, residual=None, res_scale=1.0):
    """ConvLayer = [Blur?] -> EqualConv2d -> [FusedLeakyReLU?] (+fused res)."""
    if p["downsample"]:
        x = pallas_blur(x, p["blur_kernel"], p["blur_pad"])
        stride, padding = 2, 0
    else:
        stride, padding = 1, p["padding"]
    w = p["weight"]                                  # (out, in, k, k)
    out_ch, in_ch, k, _ = w.shape
    scale = 1.0 / math.sqrt(in_ch * k * k)
    if padding > 0:
        x = jnp.pad(x, ((0, 0), (padding, padding), (padding, padding), (0, 0)))
    patches, (N, Ho, Wo) = _extract_patches(x, k, stride)
    w2 = jnp.transpose(w, (2, 3, 1, 0)).reshape(k * k * in_ch, out_ch) * scale
    bias = p["act_bias"] if p["activate"] else p["conv_bias"]
    res2 = None
    if residual is not None:
        assert residual.shape[:3] == (N, Ho, Wo)
        res2 = residual.reshape(N * Ho * Wo, out_ch)
    out = pallas_matmul(patches, w2, bias, activate=p["activate"],
                        residual=res2, res_scale=res_scale)
    return out.reshape(N, Ho, Wo, out_ch)


def discriminator_forward(params, x_nchw):
    x = jnp.transpose(x_nchw.astype(jnp.float32), (0, 2, 3, 1))   # -> NHWC
    x = conv_layer_forward(params["conv0"], x)
    for rb in params["resblocks"]:
        skip = conv_layer_forward(rb["skip"], x)
        out = conv_layer_forward(rb["conv1"], x)
        # residual add + 1/sqrt(2) fused into the conv2 matmul epilogue.
        x = conv_layer_forward(rb["conv2"], out, residual=skip,
                               res_scale=1.0 / _SQRT2)

    # minibatch-stddev feature (stddev_feat = 1).
    # TODO(synk): tiny O(N*H*W*C) statistic, kept as plain-JAX glue.
    N, H, W, C = x.shape
    group = min(N, params["stddev_group"])
    y = x.reshape(group, N // group, H, W, C)
    std = jnp.sqrt(jnp.var(y, axis=0) + 1e-8)            # (M, H, W, C)
    sc = jnp.mean(std, axis=(1, 2, 3))                    # (M,)
    stmap = jnp.broadcast_to(jnp.tile(sc, group)[:, None, None, None],
                             (N, H, W, 1))
    x = jnp.concatenate([x, stmap], axis=-1)

    x = conv_layer_forward(params["final_conv"], x)
    # Flatten in NCHW order to match torch's out.view(batch, -1).
    xf = jnp.transpose(x, (0, 3, 1, 2)).reshape(N, -1)
    l0, l1 = params["final_linear"]
    h = pallas_matmul(xf, (l0["weight"] * l0["scale"]).T,
                      l0["bias"] * l0["lr_mul"], activate=True)
    out = pallas_matmul(h, (l1["weight"] * l1["scale"]).T,
                        l1["bias"] * l1["lr_mul"], activate=False)
    return out


# ---------------------------------------------------------------------------
# Parameter construction (faithful to the PyTorch module structure).
# ---------------------------------------------------------------------------
def init_conv_layer(key, in_ch, out_ch, ksize, *, downsample=False,
                    blur_kernel=(1, 3, 3, 1), bias=True, activate=True):
    kw, kb1, kb2 = jax.random.split(key, 3)
    p = {
        "weight": jax.random.normal(kw, (out_ch, in_ch, ksize, ksize),
                                    jnp.float32),
        "activate": activate,
        "downsample": downsample,
        "conv_bias": None,
        "act_bias": None,
        "padding": 0,
        "blur_kernel": None,
        "blur_pad": None,
    }
    if downsample:
        factor = 2
        pd = len(blur_kernel) - factor + (ksize - 1)
        p["blur_pad"] = ((pd + 1) // 2, pd // 2)
        p["blur_kernel"] = make_kernel(blur_kernel)
        p["padding"] = 0
    else:
        p["padding"] = ksize // 2
    if bias and not activate:
        p["conv_bias"] = 0.1 * jax.random.normal(kb1, (out_ch,), jnp.float32)
    if activate:
        p["act_bias"] = (0.1 * jax.random.normal(kb2, (out_ch,), jnp.float32)
                         if bias else jnp.zeros((out_ch,), jnp.float32))
    return p


def init_equal_linear(key, in_dim, out_dim, lr_mul=1.0):
    kw, kb = jax.random.split(key)
    return {
        "weight": jax.random.normal(kw, (out_dim, in_dim), jnp.float32) / lr_mul,
        "bias": 0.1 * jax.random.normal(kb, (out_dim,), jnp.float32),
        "scale": (1.0 / math.sqrt(in_dim)) * lr_mul,
        "lr_mul": lr_mul,
    }


def init_discriminator(key, size, channel_multiplier=2,
                       blur_kernel=(1, 3, 3, 1)):
    channels = {4: 512, 8: 512, 16: 512, 32: 512,
                64: 256 * channel_multiplier, 128: 128 * channel_multiplier,
                256: 64 * channel_multiplier, 512: 32 * channel_multiplier,
                1024: 16 * channel_multiplier}
    keys = iter(jax.random.split(key, 64))
    params = {"conv0": init_conv_layer(next(keys), 3, channels[size], 1)}
    log_size = int(round(math.log2(size)))
    in_ch = channels[size]
    rbs = []
    for i in range(log_size, 2, -1):
        out_ch = channels[2 ** (i - 1)]
        rbs.append({
            "conv1": init_conv_layer(next(keys), in_ch, in_ch, 3),
            "conv2": init_conv_layer(next(keys), in_ch, out_ch, 3,
                                     downsample=True, blur_kernel=blur_kernel),
            "skip": init_conv_layer(next(keys), in_ch, out_ch, 1,
                                    downsample=True, blur_kernel=blur_kernel,
                                    activate=False, bias=False),
        })
        in_ch = out_ch
    params["resblocks"] = rbs
    params["stddev_group"] = 4
    params["final_conv"] = init_conv_layer(next(keys), in_ch + 1, channels[4], 3)
    params["final_linear"] = [
        init_equal_linear(next(keys), channels[4] * 4 * 4, channels[4]),
        init_equal_linear(next(keys), channels[4], 1),
    ]
    return params


# ---------------------------------------------------------------------------
# Pure-JAX reference (NCHW, lax.conv) for a correctness check.
# ---------------------------------------------------------------------------
def _ref_blur(x, fir_kernel, pad):
    pad0, pad1 = pad
    C = x.shape[1]
    xp = jnp.pad(x, ((0, 0), (0, 0), (pad0, pad1), (pad0, pad1)))
    wf = jnp.asarray(np.asarray(fir_kernel, np.float32)[::-1, ::-1])
    wf = jnp.tile(wf[None, None], (C, 1, 1, 1))
    return lax.conv_general_dilated(
        xp, wf, (1, 1), "VALID", feature_group_count=C,
        dimension_numbers=("NCHW", "OIHW", "NCHW"),
        precision=lax.Precision.HIGHEST)


def _ref_conv_layer(p, x):
    if p["downsample"]:
        x = _ref_blur(x, p["blur_kernel"], p["blur_pad"])
        stride, padding = 2, 0
    else:
        stride, padding = 1, p["padding"]
    w = p["weight"]
    out_ch, in_ch, k, _ = w.shape
    scale = 1.0 / math.sqrt(in_ch * k * k)
    out = lax.conv_general_dilated(
        x, w * scale, (stride, stride),
        [(padding, padding), (padding, padding)],
        dimension_numbers=("NCHW", "OIHW", "NCHW"),
        precision=lax.Precision.HIGHEST)
    if p["conv_bias"] is not None:
        out = out + p["conv_bias"][None, :, None, None]
    if p["activate"]:
        out = out + p["act_bias"][None, :, None, None]
        out = jnp.where(out >= 0, out, 0.2 * out) * _SQRT2
    return out


def _ref_discriminator(params, x):
    out = _ref_conv_layer(params["conv0"], x)
    for rb in params["resblocks"]:
        o = _ref_conv_layer(rb["conv1"], out)
        o = _ref_conv_layer(rb["conv2"], o)
        s = _ref_conv_layer(rb["skip"], out)
        out = (o + s) / _SQRT2
    N, C, H, W = out.shape
    group = min(N, params["stddev_group"])
    y = out.reshape(group, N // group, 1, C, H, W)
    std = jnp.sqrt(jnp.var(y, axis=0) + 1e-8)
    stm = jnp.mean(std, axis=(2, 3, 4), keepdims=True)
    stm = jnp.squeeze(stm, axis=2)
    stm = jnp.tile(stm, (group, 1, H, W))
    out = jnp.concatenate([out, stm], axis=1)
    out = _ref_conv_layer(params["final_conv"], out)
    out = out.reshape(N, -1)
    l0, l1 = params["final_linear"]
    h = jnp.dot(out, (l0["weight"] * l0["scale"]).T,
                precision=lax.Precision.HIGHEST) + l0["bias"] * l0["lr_mul"]
    h = jnp.where(h >= 0, h, 0.2 * h) * _SQRT2
    return jnp.dot(h, (l1["weight"] * l1["scale"]).T,
                   precision=lax.Precision.HIGHEST) + l1["bias"] * l1["lr_mul"]


# ---------------------------------------------------------------------------
if __name__ == "__main__":
    key = jax.random.PRNGKey(0)
    kx, kp = jax.random.split(key)
    size, N = 16, 2
    x = jax.random.normal(kx, (N, 3, size, size), dtype=jnp.float32)

    params = init_discriminator(kp, size, channel_multiplier=2)

    out = discriminator_forward(params, x)
    out = jax.block_until_ready(out)
    assert out.shape == (N, 1), out.shape

    ref = jax.block_until_ready(_ref_discriminator(params, x))
    err = float(jnp.linalg.norm(out - ref) / (jnp.linalg.norm(ref) + 1e-6))
    assert err < 5e-2, f"relative error too large: {err}"

    print("KERNEL_OK")
</pallas_src>

<mosaic_0001>
module attributes {stable_mosaic.version = 11 : i64} {
  func.func @_matmul_kernel(%arg0: i32, %arg1: i32, %arg2: i32, %arg3: memref<128x128xf32, #tpu.memory_space<vmem>>, %arg4: memref<128x512xf32, #tpu.memory_space<vmem>>, %arg5: memref<1x512xf32, #tpu.memory_space<vmem>>, %arg6: memref<128x512xf32, #tpu.memory_space<vmem>>, %arg7: memref<128x512xf32, #tpu.memory_space<vmem>>) attributes {dimension_semantics = [#tpu.dimension_semantics<parallel>, #tpu.dimension_semantics<parallel>, #tpu.dimension_semantics<arbitrary>], iteration_bounds = array<i64: 4, 1, 1>, scalar_prefetch = 0 : i64, scratch_operands = 1 : i64, tpu.core_type = #tpu.core_type<tc>, window_params = [{transform_indices = @transform_0, window_bounds = array<i64: 128, 128>}, {transform_indices = @transform_1, window_bounds = array<i64: 128, 512>}, {transform_indices = @transform_2, window_bounds = array<i64: 1, 512>}, {transform_indices = @transform_3, window_bounds = array<i64: 128, 512>}]} {
    %c0_i32 = arith.constant 0 : i32
    %0 = arith.cmpi eq, %arg2, %c0_i32 : i32
    %1 = arith.extui %0 : i1 to i32
    %c0_i32_0 = arith.constant 0 : i32
    %2 = arith.cmpi ne, %1, %c0_i32_0 : i32
    scf.if %2 {
      %cst_10 = arith.constant 0.000000e+00 : f32
      %12 = vector.broadcast %cst_10 : f32 to vector<128x512xf32>
      %c0_11 = arith.constant 0 : index
      %c0_12 = arith.constant 0 : index
      %13 = vector.load %arg7[%c0_11, %c0_12] : memref<128x512xf32, #tpu.memory_space<vmem>>, vector<128x512xf32>
      tpu.vector_store %arg7[%c0_11, %c0_12], %12 {strides = array<i32>} : memref<128x512xf32, #tpu.memory_space<vmem>>, vector<128x512xf32>,
    } else {
    }
    %c0 = arith.constant 0 : index
    %c0_1 = arith.constant 0 : index
    %3 = vector.load %arg7[%c0, %c0_1] : memref<128x512xf32, #tpu.memory_space<vmem>>, vector<128x512xf32>
    %c0_2 = arith.constant 0 : index
    %c0_3 = arith.constant 0 : index
    %4 = vector.load %arg3[%c0_2, %c0_3] : memref<128x128xf32, #tpu.memory_space<vmem>>, vector<128x128xf32>
    %c0_4 = arith.constant 0 : index
    %c0_5 = arith.constant 0 : index
    %5 = vector.load %arg4[%c0_4, %c0_5] : memref<128x512xf32, #tpu.memory_space<vmem>>, vector<128x512xf32>
    %cst = arith.constant dense<0.000000e+00> : vector<128x512xf32>
    %6 = tpu.matmul %4, %5, %cst {dimension_numbers = #tpu.dot_dimension_numbers<[1], [0], [0], [1], [0, 0, 1, 1], [], []>} : vector<128x128xf32>, vector<128x512xf32>, vector<128x512xf32> -> vector<128x512xf32>
    %7 = arith.addf %3, %6 : vector<128x512xf32>
    %c0_6 = arith.constant 0 : index
    %c0_7 = arith.constant 0 : index
    %8 = vector.load %arg7[%c0_6, %c0_7] : memref<128x512xf32, #tpu.memory_space<vmem>>, vector<128x512xf32>
    tpu.vector_store %arg7[%c0_6, %c0_7], %7 {strides = array<i32>} : memref<128x512xf32, #tpu.memory_space<vmem>>, vector<128x512xf32>,
    %c0_i32_8 = arith.constant 0 : i32
    %9 = arith.cmpi eq, %arg2, %c0_i32_8 : i32
    %10 = arith.extui %9 : i1 to i32
    %c0_i32_9 = arith.constant 0 : i32
    %11 = arith.cmpi ne, %10, %c0_i32_9 : i32
    scf.if %11 {
      %c0_10 = arith.constant 0 : index
      %c0_11 = arith.constant 0 : index
      %12 = vector.load %arg7[%c0_10, %c0_11] : memref<128x512xf32, #tpu.memory_space<vmem>>, vector<128x512xf32>
      %c0_12 = arith.constant 0 : index
      %c0_13 = arith.constant 0 : index
      %13 = vector.load %arg5[%c0_12, %c0_13] : memref<1x512xf32, #tpu.memory_space<vmem>>, vector<1x512xf32>
      %14 = vector.broadcast %13 : vector<1x512xf32> to vector<128x512xf32>
      %15 = arith.addf %12, %14 : vector<128x512xf32>
      %cst_14 = arith.constant 0.000000e+00 : f32
      %16 = vector.broadcast %cst_14 : f32 to vector<128x512xf32>
      %17 = arith.cmpf oge, %15, %16 : vector<128x512xf32>
      %cst_15 = arith.constant 2.000000e-01 : f32
      %18 = vector.broadcast %cst_15 : f32 to vector<128x512xf32>
      %19 = arith.mulf %15, %18 : vector<128x512xf32>
      %20 = arith.select %17, %15, %19 : vector<128x512xi1>, vector<128x512xf32>
      %cst_16 = arith.constant 1.41421354 : f32
      %21 = vector.broadcast %cst_16 : f32 to vector<128x512xf32>
      %22 = arith.mulf %20, %21 : vector<128x512xf32>
      %c0_17 = arith.constant 0 : index
      %c0_18 = arith.constant 0 : index
      %23 = vector.load %arg6[%c0_17, %c0_18] : memref<128x512xf32, #tpu.memory_space<vmem>>, vector<128x512xf32>
      tpu.vector_store %arg6[%c0_17, %c0_18], %22 {strides = array<i32>} : memref<128x512xf32, #tpu.memory_space<vmem>>, vector<128x512xf32>,
    } else {
    }
    return
  }
  func.func @transform_0(%arg0: i32, %arg1: i32, %arg2: i32) -> (i32, i32) {
    %c0_i32 = arith.constant 0 : i32
    return %arg0, %arg2 : i32, i32
  }
  func.func @transform_1(%arg0: i32, %arg1: i32, %arg2: i32) -> (i32, i32) {
    %c0_i32 = arith.constant 0 : i32
    return %arg2, %arg1 : i32, i32
  }
  func.func @transform_2(%arg0: i32, %arg1: i32, %arg2: i32) -> (i32, i32) {
    %c0_i32 = arith.constant 0 : i32
    %c0_i32_0 = arith.constant 0 : i32
    return %c0_i32, %arg1 : i32, i32
  }
  func.func @transform_3(%arg0: i32, %arg1: i32, %arg2: i32) -> (i32, i32) {
    %c0_i32 = arith.constant 0 : i32
    return %arg0, %arg1 : i32, i32
  }
}

</mosaic_0001>

<llo_original>
// kernel: tpu_custom_call.1
$region0: #{tpu_custom_call.1}
  #allocation0 [shape = 'u32[]', space=smem, size = 0x4, offset = 0x4, fixed_abs, tag = 'smem constant byte address 0x4 - core index']
  #allocation1 [shape = 'u32[144,128]{1,0:T(1,128)}', space=vmem, size = 0x12000, scoped, tag = 'internal scratch']
  #allocation2 [shape = 'f32[128,512]{1,0:T(8,128)}', space=vmem, size = 0x40000, scoped, tag = 'scratch operand']
  %s0 = inlined_call_operand.hbm [shape: f32[512,128], index: 0, kind: input, shape index: {}]
  %s1 = inlined_call_operand.hbm [shape: f32[128,512], index: 1, kind: input, shape index: {}]
  %s2 = inlined_call_operand.vmem [shape: f32[1,512], index: 2, kind: input, shape index: {}]
  %s3 = inlined_call_operand.hbm [shape: f32[512,512], index: 3, kind: output, shape index: {}]
  %s4 = sld [smem:[#allocation0]]
  $region61: #{tpu_custom_call.1} parent=0
    _
  %s6 = ssub.s32 1, %s4
  %s7 = scalar_select 0, %s6, %s4
  $region1: #{tpu_custom_call.1} parent=0
    #allocation3 [shape = 'u8[131072]{0}', space=vmem, size = 0x20000, scoped, tag = 'input window, operand 0']
    #allocation4 [shape = 's32[2]{0}', space=sflag, size = 0x8, scoped, tag = 'scoped memory for tpu_custom_call.1']
    #allocation5 [shape = 's32[2]{0}', space=sflag, size = 0x8, scoped, tag = 'scoped memory for tpu_custom_call.1']
    #allocation6 [shape = 'u8[262144]{0}', space=vmem, size = 0x40000, scoped, tag = 'input window, operand 1, single buffered']
    #allocation7 [shape = 's32[1]{0}', space=sflag, size = 0x4, scoped, tag = 'scoped memory for tpu_custom_call.1']
    #allocation8 [shape = 'u8[524288]{0}', space=vmem, size = 0x80000, scoped, tag = 'output window, operand 0']
    %8 = vsyncpa [#allocation4], 0
    %s9 = scalar_lea.sflag [#allocation4], 1
    %10 = vsyncpa %s9, 0
    %11 = vsyncpa [#allocation7], 0
    %12 = vsyncpa [#allocation5], 0
    %s13 = scalar_lea.sflag [#allocation5], 1
    %14 = vsyncpa %s13, 0
    loop: start=0, step=1, limit=6
    $region2: #{tpu_custom_call.1} parent=1 // loop_pre_header
      _
    $region3: #{tpu_custom_call.1} parent=1 // loop_header
      %s16 = sphi 0, %s20
      %p17 = scmp.ge.s32.totalorder %s16, 6
      %s23 = sphi 0, %s42
      %s24 = sphi 0, %s38
      %s25 = sphi 0, %s34
      %s26 = sphi 0, %s23
      %s27 = sphi 0, %s24
      %s28 = sphi 0, %s25
      %s29 = sphi 0, %s26
      %s30 = sphi 0, %s27
      %s31 = sphi 0, %s28
      %s47 = sphi 0, %s49
      %s50 = sphi 0, %s47
      %s51 = sphi 0, %s50
      %s67 = sphi 0, %s51
      %s75 = sphi 0, %s77
      %s78 = sphi 0, %s75
      %s79 = sphi 0, %s78
      %s95 = sphi 0, %s79
      %s101 = sphi 0, %s103
      %s104 = sphi 0, %s101
      %s105 = sphi 0, %s104
      %s121 = sphi 0, %s105
      %s129 = sphi 0, %s131
      %s132 = sphi 0, %s129
      %s133 = sphi 0, %s132
      %s149 = sphi 0, %s133
    $region4: #{tpu_custom_call.1} parent=1 // loop_header_branch
      %19 = sbr.rel (%p17) target = $region8
    $region5: #{tpu_custom_call.1} parent=1 // loop_body
      %s21 = ssub.s32 %s16, 1
      %s22 = ssub.s32 %s16, 2
      %s32 = sadd.s32 1, %s25
      %p33 = scmp.ge.s32.totalorder %s32, 1
      %s34 = scalar_select %p33, 0, %s32
      %s35 = sadd.s32 1, %s24
      %s36 = scalar_select %p33, %s35, %s24
      %p37 = scmp.ge.s32.totalorder %s36, 1
      %s38 = scalar_select %p37, 0, %s36
      %s39 = sadd.s32 1, %s23
      %s40 = scalar_select %p37, %s39, %s23
      %p41 = scmp.ge.s32.totalorder %s40, 4
      %s42 = scalar_select %p41, 0, %s40
      %s43 = ssub.s32 %s23, %s42
      %s44 = ssub.s32 %s25, %s34
      %s45 = sor.u32 %s43, %s44
      %p46 = scmp.eq.s32.totalorder %s45, 0
      %s48 = sadd.s32 %s47, 1
      %s49 = scalar_select %p46, %s47, %s48
      %p52 = pneg %p46
      %p53 = scmp.eq.s32.totalorder %s16, 3
      %p54 = por %p52, %p53
      %p55 = scmp.ne.s32.totalorder %s47, %s50
      %p56 = scmp.eq.s32.totalorder %s16, 0
      %p57 = por %p55, %p56
      %p58 = scmp.ne.s32.totalorder %s47, %s50
      %p59 = scmp.eq.s32.totalorder %s21, 3
      %p60 = por %p58, %p59
      %p61 = scmp.ne.s32.totalorder %s50, %s51
      %p62 = scmp.eq.s32.totalorder %s21, 0
      %p63 = por %p61, %p62
      %p64 = scmp.ne.s32.totalorder %s50, %s51
      %p65 = scmp.eq.s32.totalorder %s22, 3
      %p66 = por %p64, %p65
      %p68 = scmp.ne.s32.totalorder %s51, %s67
      %p69 = scmp.eq.s32.totalorder %s22, 0
      %p70 = por %p68, %p69
      %s71 = ssub.s32 %s25, %s34
      %s72 = ssub.s32 %s24, %s38
      %s73 = sor.u32 %s71, %s72
      %p74 = scmp.eq.s32.totalorder %s73, 0
      %s76 = sadd.s32 %s75, 1
      %s77 = scalar_select %p74, %s75, %s76
      %p80 = pneg %p74
      %p81 = scmp.eq.s32.totalorder %s16, 3
      %p82 = por %p80, %p81
      %p83 = scmp.ne.s32.totalorder %s75, %s78
      %p84 = scmp.eq.s32.totalorder %s16, 0
      %p85 = por %p83, %p84
      %p86 = scmp.ne.s32.totalorder %s75, %s78
      %p87 = scmp.eq.s32.totalorder %s21, 3
      %p88 = por %p86, %p87
      %p89 = scmp.ne.s32.totalorder %s78, %s79
      %p90 = scmp.eq.s32.totalorder %s21, 0
      %p91 = por %p89, %p90
      %p92 = scmp.ne.s32.totalorder %s78, %s79
      %p93 = scmp.eq.s32.totalorder %s22, 3
      %p94 = por %p92, %p93
      %p96 = scmp.ne.s32.totalorder %s79, %s95
      %p97 = scmp.eq.s32.totalorder %s22, 0
      %p98 = por %p96, %p97
      %s99 = ssub.s32 %s24, %s38
      %p100 = scmp.eq.s32.totalorder %s99, 0
      %s102 = sadd.s32 %s101, 1
      %s103 = scalar_select %p100, %s101, %s102
      %p106 = pneg %p100
      %p107 = scmp.eq.s32.totalorder %s16, 3
      %p108 = por %p106, %p107
      %p109 = scmp.ne.s32.totalorder %s101, %s104
      %p110 = scmp.eq.s32.totalorder %s16, 0
      %p111 = por %p109, %p110
      %p112 = scmp.ne.s32.totalorder %s101, %s104
      %p113 = scmp.eq.s32.totalorder %s21, 3
      %p114 = por %p112, %p113
      %p115 = scmp.ne.s32.totalorder %s104, %s105
      %p116 = scmp.eq.s32.totalorder %s21, 0
      %p117 = por %p115, %p116
      %p118 = scmp.ne.s32.totalorder %s104, %s105
      %p119 = scmp.eq.s32.totalorder %s22, 3
      %p120 = por %p118, %p119
      %p122 = scmp.ne.s32.totalorder %s105, %s121
      %p123 = scmp.eq.s32.totalorder %s22, 0
      %p124 = por %p122, %p123
      %s125 = ssub.s32 %s23, %s42
      %s126 = ssub.s32 %s24, %s38
      %s127 = sor.u32 %s125, %s126
      %p128 = scmp.eq.s32.totalorder %s127, 0
      %s130 = sadd.s32 %s129, 1
      %s131 = scalar_select %p128, %s129, %s130
      %p134 = pneg %p128
      %p135 = scmp.eq.s32.totalorder %s16, 3
      %p136 = por %p134, %p135
      %p137 = scmp.ne.s32.totalorder %s129, %s132
      %p138 = scmp.eq.s32.totalorder %s16, 0
      %p139 = por %p137, %p138
      %p140 = scmp.ne.s32.totalorder %s129, %s132
      %p141 = scmp.eq.s32.totalorder %s21, 3
      %p142 = por %p140, %p141
      %p143 = scmp.ne.s32.totalorder %s132, %s133
      %p144 = scmp.eq.s32.totalorder %s21, 0
      %p145 = por %p143, %p144
      %p146 = scmp.ne.s32.totalorder %s132, %s133
      %p147 = scmp.eq.s32.totalorder %s22, 3
      %p148 = por %p146, %p147
      %p150 = scmp.ne.s32.totalorder %s133, %s149
      %p151 = scmp.eq.s32.totalorder %s22, 0
      %p152 = por %p150, %p151
      %p153 = scmp.le.s32.totalorder 1, %s16
      %p154 = scmp.lt.s32.totalorder %s16, 5
      %p155 = pnand %p153, %p154
      %p156 = pneg %p155
      // Predicated region
      $region9: #{tpu_custom_call.1} parent=5 // pred_check
        _
      $region10: #{tpu_custom_call.1} parent=5 // pred_check_branch
        %158 = sbr.rel (%p155) target = $region12
      $region11: #{tpu_custom_call.1} parent=5 // pred_region
        %s159 = ssub.s32 %s16, 1
        // Predicated region
        $region13: #{tpu_custom_call.1} parent=11 // pred_check
          %p160 = pneg %p91
        $region14: #{tpu_custom_call.1} parent=11 // pred_check_branch
          %162 = sbr.rel (%p160) target = $region16
        $region15: #{tpu_custom_call.1} parent=11 // pred_region
          %s163 = smul.u32 16, %s28
          %s164 = smul.u32 4, %s27
          %s166 = ssub.s32 8192, 8192
          %167 = vsyncadd [#allocation7], %s166
          %s168 = smul.addr %s163, 4
          %s169 = sadd.s32 %s164, %s168
          %s170 = smul.addr %s169, 128
          %s171 = scalar_lea.hbm %s1, %s170
          %s172 = sshll.u32 [#allocation6], 4
          %s173 = int_to_ptr.vmem [resolvable:$true] %s172
          %178 = dma.hbm_to_vmem [thread:$0]  %s171, 8192, %s173, [#allocation7], 512, 512, 32
        $region16: #{tpu_custom_call.1} parent=11 // pred_fallthru
          _
        // Predicated region
        $region17: #{tpu_custom_call.1} parent=11 // pred_check
          %p179 = pneg %p117
        $region18: #{tpu_custom_call.1} parent=11 // pred_check_branch
          %181 = sbr.rel (%p179) target = $region20
        $region19: #{tpu_custom_call.1} parent=11 // pred_region
          %s182 = smul.u32 4, %s27
          %p183 = scmp.lt.s32.totalorder %s182, 3
          %s184 = scalar_select %p183, %s182, 3
          %s185 = scalar_lea.vmem %s2, %s184
          %s186 = smul.u32 4, %s27
        $region20: #{tpu_custom_call.1} parent=11 // pred_fallthru
          _
      $region12: #{tpu_custom_call.1} parent=5 // pred_fallthru
        _
      %p187 = scmp.lt.s32.totalorder %s16, 4
      // Predicated region
      $region21: #{tpu_custom_call.1} parent=5 // pred_check
        %p188 = pneg %p187
      $region22: #{tpu_custom_call.1} parent=5 // pred_check_branch
        %190 = sbr.rel (%p188) target = $region24
      $region23: #{tpu_custom_call.1} parent=5 // pred_region
        // Predicated region
        $region25: #{tpu_custom_call.1} parent=23 // pred_check
          %p191 = pneg %p57
        $region26: #{tpu_custom_call.1} parent=23 // pred_check_branch
          %193 = sbr.rel (%p191) target = $region28
        $region27: #{tpu_custom_call.1} parent=23 // pred_region
          %s194 = sand.u32 %s47, 1
          %s195 = scalar_lea.sflag [#allocation4], %s194
          %s196 = sand.u32 %s47, 1
          %s197 = smul.addr %s196, 128
          %s198 = scalar_lea.vmem [#allocation3], %s197
          %s199 = smul.u32 16, %s23
          %s201 = ssub.s32 2048, 2048
          %202 = vsyncadd %s195, %s201
          %s203 = sadd.s32 %s25, %s199
          %s204 = smul.addr %s203, 128
          %s205 = scalar_lea.hbm %s0, %s204
          %s206 = sshll.u32 %s198, 4
          %s207 = int_to_ptr.vmem [resolvable:$true] %s206
          %212 = dma.hbm_to_vmem [thread:$0]  %s205, 2048, %s207, %s195, 128, 128, 8
        $region28: #{tpu_custom_call.1} parent=23 // pred_fallthru
          _
      $region24: #{tpu_custom_call.1} parent=5 // pred_fallthru
        _
      %p213 = scmp.le.s32.totalorder 1, %s16
      %p214 = scmp.lt.s32.totalorder %s16, 5
      %p215 = pnand %p213, %p214
      %p216 = pneg %p215
      // Predicated region
      $region29: #{tpu_custom_call.1} parent=5 // pred_check
        _
      $region30: #{tpu_custom_call.1} parent=5 // pred_check_branch
        %218 = sbr.rel (%p215) target = $region32
      $region31: #{tpu_custom_call.1} parent=5 // pred_region
        %s219 = ssub.s32 %s16, 1
        %s220 = sand.u32 %s50, 1
        %s221 = scalar_lea.sflag [#allocation4], %s220
        %s222 = sand.u32 %s50, 1
        %s223 = smul.addr %s222, 128
        %s224 = scalar_lea.vmem [#allocation3], %s223
        // Predicated region
        $region33: #{tpu_custom_call.1} parent=31 // pred_check
          %p225 = pneg %p63
        $region34: #{tpu_custom_call.1} parent=31 // pred_check_branch
          %227 = sbr.rel (%p225) target = $region36
        $region35: #{tpu_custom_call.1} parent=31 // pred_region
          %228 = dma.done %s221, 2048
        $region36: #{tpu_custom_call.1} parent=31 // pred_fallthru
          _
        // Predicated region
        $region37: #{tpu_custom_call.1} parent=31 // pred_check
          %p229 = pneg %p91
        $region38: #{tpu_custom_call.1} parent=31 // pred_check_branch
          %231 = sbr.rel (%p229) target = $region40
        $region39: #{tpu_custom_call.1} parent=31 // pred_region
          %232 = dma.done [#allocation7], 8192
        $region40: #{tpu_custom_call.1} parent=31 // pred_fallthru
          _
        %s233 = sand.u32 %s50, 1
        %s234 = scalar_lea.sflag [#allocation4], %s233
        %s235 = sand.u32 %s50, 1
        %s236 = smul.addr %s235, 128
        %s237 = scalar_lea.vmem [#allocation3], %s236
        %p238 = pneg %p63
        %p239 = pneg %p60
        %p240 = pneg %p91
        %p241 = pneg %p88
        %s242 = smul.u32 4, %s27
        %p243 = scmp.lt.s32.totalorder %s242, 3
        %s244 = scalar_select %p243, %s242, 3
        %s245 = scalar_lea.vmem %s2, %s244
        %p246 = pneg %p117
        %p247 = pneg %p114
        %p248 = pneg %p145
        %p249 = pneg %p142
        %s250 = sand.u32 %s132, 1
        %s251 = scalar_lea.sflag [#allocation5], %s250
        %s252 = sand.u32 %s132, 1
        %s253 = smul.addr %s252, 512
        %s254 = scalar_lea.vmem [#allocation8], %s253
        %s255 = smul.u32 16, %s26
        %s256 = smul.u32 16, %s28
        %s257 = smul.u32 4, %s27
        %s258 = smul.u32 4, %s27
        %p259 = scmp.lt.s32.totalorder %s258, 3
        %s260 = scalar_select %p259, %s258, 3
        %s261 = scalar_lea.vmem %s2, %s260
        %s262 = smul.u32 4, %s27
        %s263 = smul.u32 16, %s26
        %s264 = smul.u32 4, %s27
        %p265 = scmp.eq.s32.totalorder %s28, 0
        // Predicated region
        $region41: #{tpu_custom_call.1} parent=31 // pred_check
          %p266 = pneg %p265
        $region42: #{tpu_custom_call.1} parent=31 // pred_check_branch
          %268 = sbr.rel (%p266) target = $region44
        $region43: #{tpu_custom_call.1} parent=31 // pred_region
          %269 = vst [vmem:[#allocation2] sm:$0xff] 0.0
          %270 = vst [vmem:[#allocation2 + $0x8] sm:$0xff] 0.0
          %271 = vst [vmem:[#allocation2 + $0x10] sm:$0xff] 0.0
          %272 = vst [vmem:[#allocation2 + $0x18] sm:$0xff] 0.0
          %273 = vst [vmem:[#allocation2 + $0x20] sm:$0xff] 0.0
          %274 = vst [vmem:[#allocation2 + $0x28] sm:$0xff] 0.0
          %275 = vst [vmem:[#allocation2 + $0x30] sm:$0xff] 0.0
          %276 = vst [vmem:[#allocation2 + $0x38] sm:$0xff] 0.0
          %277 = vst [vmem:[#allocation2 + $0x40] sm:$0xff] 0.0
          %278 = vst [vmem:[#allocation2 + $0x48] sm:$0xff] 0.0
          %279 = vst [vmem:[#allocation2 + $0x50] sm:$0xff] 0.0
          %280 = vst [vmem:[#allocation2 + $0x58] sm:$0xff] 0.0
          %281 = vst [vmem:[#allocation2 + $0x60] sm:$0xff] 0.0
          %282 = vst [vmem:[#allocation2 + $0x68] sm:$0xff] 0.0
          %283 = vst [vmem:[#allocation2 + $0x70] sm:$0xff] 0.0
          %284 = vst [vmem:[#allocation2 + $0x78] sm:$0xff] 0.0
          %285 = vst [vmem:[#allocation2 + $0x80] sm:$0xff] 0.0
          %286 = vst [vmem:[#allocation2 + $0x88] sm:$0xff] 0.0
          %287 = vst [vmem:[#allocation2 + $0x90] sm:$0xff] 0.0
          %288 = vst [vmem:[#allocation2 + $0x98] sm:$0xff] 0.0
          %289 = vst [vmem:[#allocation2 + $0xa0] sm:$0xff] 0.0
          %290 = vst [vmem:[#allocation2 + $0xa8] sm:$0xff] 0.0
          %291 = vst [vmem:[#allocation2 + $0xb0] sm:$0xff] 0.0
          %292 = vst [vmem:[#allocation2 + $0xb8] sm:$0xff] 0.0
          %293 = vst [vmem:[#allocation2 + $0xc0] sm:$0xff] 0.0
          %294 = vst [vmem:[#allocation2 + $0xc8] sm:$0xff] 0.0
          %295 = vst [vmem:[#allocation2 + $0xd0] sm:$0xff] 0.0
          %296 = vst [vmem:[#allocation2 + $0xd8] sm:$0xff] 0.0
          %297 = vst [vmem:[#allocation2 + $0xe0] sm:$0xff] 0.0
          %298 = vst [vmem:[#allocation2 + $0xe8] sm:$0xff] 0.0
          %299 = vst [vmem:[#allocation2 + $0xf0] sm:$0xff] 0.0
          %300 = vst [vmem:[#allocation2 + $0xf8] sm:$0xff] 0.0
          %301 = vst [vmem:[#allocation2 + $0x100] sm:$0xff] 0.0
          %302 = vst [vmem:[#allocation2 + $0x108] sm:$0xff] 0.0
          %303 = vst [vmem:[#allocation2 + $0x110] sm:$0xff] 0.0
          %304 = vst [vmem:[#allocation2 + $0x118] sm:$0xff] 0.0
          %305 = vst [vmem:[#allocation2 + $0x120] sm:$0xff] 0.0
          %306 = vst [vmem:[#allocation2 + $0x128] sm:$0xff] 0.0
          %307 = vst [vmem:[#allocation2 + $0x130] sm:$0xff] 0.0
          %308 = vst [vmem:[#allocation2 + $0x138] sm:$0xff] 0.0
          %309 = vst [vmem:[#allocation2 + $0x140] sm:$0xff] 0.0
          %310 = vst [vmem:[#allocation2 + $0x148] sm:$0xff] 0.0
          %311 = vst [vmem:[#allocation2 + $0x150] sm:$0xff] 0.0
          %312 = vst [vmem:[#allocation2 + $0x158] sm:$0xff] 0.0
          %313 = vst [vmem:[#allocation2 + $0x160] sm:$0xff] 0.0
          %314 = vst [vmem:[#allocation2 + $0x168] sm:$0xff] 0.0
          %315 = vst [vmem:[#allocation2 + $0x170] sm:$0xff] 0.0
          %316 = vst [vmem:[#allocation2 + $0x178] sm:$0xff] 0.0
          %317 = vst [vmem:[#allocation2 + $0x180] sm:$0xff] 0.0
          %318 = vst [vmem:[#allocation2 + $0x188] sm:$0xff] 0.0
          %319 = vst [vmem:[#allocation2 + $0x190] sm:$0xff] 0.0
          %320 = vst [vmem:[#allocation2 + $0x198] sm:$0xff] 0.0
          %321 = vst [vmem:[#allocation2 + $0x1a0] sm:$0xff] 0.0
          %322 = vst [vmem:[#allocation2 + $0x1a8] sm:$0xff] 0.0
          %323 = vst [vmem:[#allocation2 + $0x1b0] sm:$0xff] 0.0
          %324 = vst [vmem:[#allocation2 + $0x1b8] sm:$0xff] 0.0
          %325 = vst [vmem:[#allocation2 + $0x1c0] sm:$0xff] 0.0
          %326 = vst [vmem:[#allocation2 + $0x1c8] sm:$0xff] 0.0
          %327 = vst [vmem:[#allocation2 + $0x1d0] sm:$0xff] 0.0
          %328 = vst [vmem:[#allocation2 + $0x1d8] sm:$0xff] 0.0
          %329 = vst [vmem:[#allocation2 + $0x1e0] sm:$0xff] 0.0
          %330 = vst [vmem:[#allocation2 + $0x1e8] sm:$0xff] 0.0
          %331 = vst [vmem:[#allocation2 + $0x1f0] sm:$0xff] 0.0
          %332 = vst [vmem:[#allocation2 + $0x1f8] sm:$0xff] 0.0
        $region44: #{tpu_custom_call.1} parent=31 // pred_fallthru
          _
        %v333 = vld [vmem:[#allocation2] sm:$0xff]
        %v334 = vld [vmem:[#allocation2 + $0x8] sm:$0xff]
        %v335 = vld [vmem:[#allocation2 + $0x10] sm:$0xff]
        %v336 = vld [vmem:[#allocation2 + $0x18] sm:$0xff]
        %v337 = vld [vmem:[#allocation2 + $0x20] sm:$0xff]
        %v338 = vld [vmem:[#allocation2 + $0x28] sm:$0xff]
        %v339 = vld [vmem:[#allocation2 + $0x30] sm:$0xff]
        %v340 = vld [vmem:[#allocation2 + $0x38] sm:$0xff]
        %v341 = vld [vmem:[#allocation2 + $0x40] sm:$0xff]
        %v342 = vld [vmem:[#allocation2 + $0x48] sm:$0xff]
        %v343 = vld [vmem:[#allocation2 + $0x50] sm:$0xff]
        %v344 = vld [vmem:[#allocation2 + $0x58] sm:$0xff]
        %v345 = vld [vmem:[#allocation2 + $0x60] sm:$0xff]
        %v346 = vld [vmem:[#allocation2 + $0x68] sm:$0xff]
        %v347 = vld [vmem:[#allocation2 + $0x70] sm:$0xff]
        %v348 = vld [vmem:[#allocation2 + $0x78] sm:$0xff]
        %v349 = vld [vmem:[#allocation2 + $0x80] sm:$0xff]
        %v350 = vld [vmem:[#allocation2 + $0x88] sm:$0xff]
        %v351 = vld [vmem:[#allocation2 + $0x90] sm:$0xff]
        %v352 = vld [vmem:[#allocation2 + $0x98] sm:$0xff]
        %v353 = vld [vmem:[#allocation2 + $0xa0] sm:$0xff]
        %v354 = vld [vmem:[#allocation2 + $0xa8] sm:$0xff]
        %v355 = vld [vmem:[#allocation2 + $0xb0] sm:$0xff]
        %v356 = vld [vmem:[#allocation2 + $0xb8] sm:$0xff]
        %v357 = vld [vmem:[#allocation2 + $0xc0] sm:$0xff]
        %v358 = vld [vmem:[#allocation2 + $0xc8] sm:$0xff]
        %v359 = vld [vmem:[#allocation2 + $0xd0] sm:$0xff]
        %v360 = vld [vmem:[#allocation2 + $0xd8] sm:$0xff]
        %v361 = vld [vmem:[#allocation2 + $0xe0] sm:$0xff]
        %v362 = vld [vmem:[#allocation2 + $0xe8] sm:$0xff]
        %v363 = vld [vmem:[#allocation2 + $0xf0] sm:$0xff]
        %v364 = vld [vmem:[#allocation2 + $0xf8] sm:$0xff]
        %v365 = vld [vmem:[#allocation2 + $0x100] sm:$0xff]
        %v366 = vld [vmem:[#allocation2 + $0x108] sm:$0xff]
        %v367 = vld [vmem:[#allocation2 + $0x110] sm:$0xff]
        %v368 = vld [vmem:[#allocation2 + $0x118] sm:$0xff]
        %v369 = vld [vmem:[#allocation2 + $0x120] sm:$0xff]
        %v370 = vld [vmem:[#allocation2 + $0x128] sm:$0xff]
        %v371 = vld [vmem:[#allocation2 + $0x130] sm:$0xff]
        %v372 = vld [vmem:[#allocation2 + $0x138] sm:$0xff]
        %v373 = vld [vmem:[#allocation2 + $0x140] sm:$0xff]
        %v374 = vld [vmem:[#allocation2 + $0x148] sm:$0xff]
        %v375 = vld [vmem:[#allocation2 + $0x150] sm:$0xff]
        %v376 = vld [vmem:[#allocation2 + $0x158] sm:$0xff]
        %v377 = vld [vmem:[#allocation2 + $0x160] sm:$0xff]
        %v378 = vld [vmem:[#allocation2 + $0x168] sm:$0xff]
        %v379 = vld [vmem:[#allocation2 + $0x170] sm:$0xff]
        %v380 = vld [vmem:[#allocation2 + $0x178] sm:$0xff]
        %v381 = vld [vmem:[#allocation2 + $0x180] sm:$0xff]
        %v382 = vld [vmem:[#allocation2 + $0x188] sm:$0xff]
        %v383 = vld [vmem:[#allocation2 + $0x190] sm:$0xff]
        %v384 = vld [vmem:[#allocation2 + $0x198] sm:$0xff]
        %v385 = vld [vmem:[#allocation2 + $0x1a0] sm:$0xff]
        %v386 = vld [vmem:[#allocation2 + $0x1a8] sm:$0xff]
        %v387 = vld [vmem:[#allocation2 + $0x1b0] sm:$0xff]
        %v388 = vld [vmem:[#allocation2 + $0x1b8] sm:$0xff]
        %v389 = vld [vmem:[#allocation2 + $0x1c0] sm:$0xff]
        %v390 = vld [vmem:[#allocation2 + $0x1c8] sm:$0xff]
        %v391 = vld [vmem:[#allocation2 + $0x1d0] sm:$0xff]
        %v392 = vld [vmem:[#allocation2 + $0x1d8] sm:$0xff]
        %v393 = vld [vmem:[#allocation2 + $0x1e0] sm:$0xff]
        %v394 = vld [vmem:[#allocation2 + $0x1e8] sm:$0xff]
        %v395 = vld [vmem:[#allocation2 + $0x1f0] sm:$0xff]
        %v396 = vld [vmem:[#allocation2 + $0x1f8] sm:$0xff]
        %v397 = vld [vmem:[%s224] sm:$0xff]
        %v398 = vld [vmem:[%s224 + $0x8] sm:$0xff]
        %v399 = vld [vmem:[%s224 + $0x10] sm:$0xff]
        %v400 = vld [vmem:[%s224 + $0x18] sm:$0xff]
        %v401 = vld [vmem:[%s224 + $0x20] sm:$0xff]
        %v402 = vld [vmem:[%s224 + $0x28] sm:$0xff]
        %v403 = vld [vmem:[%s224 + $0x30] sm:$0xff]
        %v404 = vld [vmem:[%s224 + $0x38] sm:$0xff]
        %v405 = vld [vmem:[%s224 + $0x40] sm:$0xff]
        %v406 = vld [vmem:[%s224 + $0x48] sm:$0xff]
        %v407 = vld [vmem:[%s224 + $0x50] sm:$0xff]
        %v408 = vld [vmem:[%s224 + $0x58] sm:$0xff]
        %v409 = vld [vmem:[%s224 + $0x60] sm:$0xff]
        %v410 = vld [vmem:[%s224 + $0x68] sm:$0xff]
        %v411 = vld [vmem:[%s224 + $0x70] sm:$0xff]
        %v412 = vld [vmem:[%s224 + $0x78] sm:$0xff]
        %v413 = vld [vmem:[#allocation6] sm:$0xff]
        %v414 = vld [vmem:[#allocation6 + $0x8] sm:$0xff]
        %v415 = vld [vmem:[#allocation6 + $0x10] sm:$0xff]
        %v416 = vld [vmem:[#allocation6 + $0x18] sm:$0xff]
        %v417 = vld [vmem:[#allocation6 + $0x20] sm:$0xff]
        %v418 = vld [vmem:[#allocation6 + $0x28] sm:$0xff]
        %v419 = vld [vmem:[#allocation6 + $0x30] sm:$0xff]
        %v420 = vld [vmem:[#allocation6 + $0x38] sm:$0xff]
        %v421 = vld [vmem:[#allocation6 + $0x40] sm:$0xff]
        %v422 = vld [vmem:[#allocation6 + $0x48] sm:$0xff]
        %v423 = vld [vmem:[#allocation6 + $0x50] sm:$0xff]
        %v424 = vld [vmem:[#allocation6 + $0x58] sm:$0xff]
        %v425 = vld [vmem:[#allocation6 + $0x60] sm:$0xff]
        %v426 = vld [vmem:[#allocation6 + $0x68] sm:$0xff]
        %v427 = vld [vmem:[#allocation6 + $0x70] sm:$0xff]
        %v428 = vld [vmem:[#allocation6 + $0x78] sm:$0xff]
        %v429 = vld [vmem:[#allocation6 + $0x80] sm:$0xff]
        %v430 = vld [vmem:[#allocation6 + $0x88] sm:$0xff]
        %v431 = vld [vmem:[#allocation6 + $0x90] sm:$0xff]
        %v432 = vld [vmem:[#allocation6 + $0x98] sm:$0xff]
        %v433 = vld [vmem:[#allocation6 + $0xa0] sm:$0xff]
        %v434 = vld [vmem:[#allocation6 + $0xa8] sm:$0xff]
        %v435 = vld [vmem:[#allocation6 + $0xb0] sm:$0xff]
        %v436 = vld [vmem:[#allocation6 + $0xb8] sm:$0xff]
        %v437 = vld [vmem:[#allocation6 + $0xc0] sm:$0xff]
        %v438 = vld [vmem:[#allocation6 + $0xc8] sm:$0xff]
        %v439 = vld [vmem:[#allocation6 + $0xd0] sm:$0xff]
        %v440 = vld [vmem:[#allocation6 + $0xd8] sm:$0xff]
        %v441 = vld [vmem:[#allocation6 + $0xe0] sm:$0xff]
        %v442 = vld [vmem:[#allocation6 + $0xe8] sm:$0xff]
        %v443 = vld [vmem:[#allocation6 + $0xf0] sm:$0xff]
        %v444 = vld [vmem:[#allocation6 + $0xf8] sm:$0xff]
        %v445 = vld [vmem:[#allocation6 + $0x100] sm:$0xff]
        %v446 = vld [vmem:[#allocation6 + $0x108] sm:$0xff]
        %v447 = vld [vmem:[#allocation6 + $0x110] sm:$0xff]
        %v448 = vld [vmem:[#allocation6 + $0x118] sm:$0xff]
        %v449 = vld [vmem:[#allocation6 + $0x120] sm:$0xff]
        %v450 = vld [vmem:[#allocation6 + $0x128] sm:$0xff]
        %v451 = vld [vmem:[#allocation6 + $0x130] sm:$0xff]
        %v452 = vld [vmem:[#allocation6 + $0x138] sm:$0xff]
        %v453 = vld [vmem:[#allocation6 + $0x140] sm:$0xff]
        %v454 = vld [vmem:[#allocation6 + $0x148] sm:$0xff]
        %v455 = vld [vmem:[#allocation6 + $0x150] sm:$0xff]
        %v456 = vld [vmem:[#allocation6 + $0x158] sm:$0xff]
        %v457 = vld [vmem:[#allocation6 + $0x160] sm:$0xff]
        %v458 = vld [vmem:[#allocation6 + $0x168] sm:$0xff]
        %v459 = vld [vmem:[#allocation6 + $0x170] sm:$0xff]
        %v460 = vld [vmem:[#allocation6 + $0x178] sm:$0xff]
        %v461 = vld [vmem:[#allocation6 + $0x180] sm:$0xff]
        %v462 = vld [vmem:[#allocation6 + $0x188] sm:$0xff]
        %v463 = vld [vmem:[#allocation6 + $0x190] sm:$0xff]
        %v464 = vld [vmem:[#allocation6 + $0x198] sm:$0xff]
        %v465 = vld [vmem:[#allocation6 + $0x1a0] sm:$0xff]
        %v466 = vld [vmem:[#allocation6 + $0x1a8] sm:$0xff]
        %v467 = vld [vmem:[#allocation6 + $0x1b0] sm:$0xff]
        %v468 = vld [vmem:[#allocation6 + $0x1b8] sm:$0xff]
        %v469 = vld [vmem:[#allocation6 + $0x1c0] sm:$0xff]
        %v470 = vld [vmem:[#allocation6 + $0x1c8] sm:$0xff]
        %v471 = vld [vmem:[#allocation6 + $0x1d0] sm:$0xff]
        %v472 = vld [vmem:[#allocation6 + $0x1d8] sm:$0xff]
        %v473 = vld [vmem:[#allocation6 + $0x1e0] sm:$0xff]
        %v474 = vld [vmem:[#allocation6 + $0x1e8] sm:$0xff]
        %v475 = vld [vmem:[#allocation6 + $0x1f0] sm:$0xff]
        %v476 = vld [vmem:[#allocation6 + $0x1f8] sm:$0xff]
        %477 = vmatprep.subr.mxu0 %v414
        %478 = vmatpush1.msra.mxu0 %v413
        %479 = vmatprep.subr.mxu0 %v418
        %480 = vmatpush1.msra.mxu0 %v417
        %481 = vmatprep.subr.mxu0 %v422
        %482 = vmatpush1.msra.mxu0 %v421
        %483 = vmatprep.subr.mxu0 %v426
        %484 = vmatpush1.msra.mxu0 %v425
        %485 = vmatprep.subr.mxu0 %v430
        %486 = vmatpush1.msra.mxu0 %v429
        %487 = vmatprep.subr.mxu0 %v434
        %488 = vmatpush1.msra.mxu0 %v433
        %489 = vmatprep.subr.mxu0 %v438
        %490 = vmatpush1.msra.mxu0 %v437
        %491 = vmatprep.subr.mxu0 %v442
        %492 = vmatpush1.msra.mxu0 %v441
        %493 = vmatprep.subr.mxu0 %v446
        %494 = vmatpush1.msra.mxu0 %v445
        %495 = vmatprep.subr.mxu0 %v450
        %496 = vmatpush1.msra.mxu0 %v449
        %497 = vmatprep.subr.mxu0 %v454
        %498 = vmatpush1.msra.mxu0 %v453
        %499 = vmatprep.subr.mxu0 %v458
        %500 = vmatpush1.msra.mxu0 %v457
        %501 = vmatprep.subr.mxu0 %v462
        %502 = vmatpush1.msra.mxu0 %v461
        %503 = vmatprep.subr.mxu0 %v466
        %504 = vmatpush1.msra.mxu0 %v465
        %505 = vmatprep.subr.mxu0 %v470
        %506 = vmatpush1.msra.mxu0 %v469
        %507 = vmatprep.subr.mxu0 %v474
        %508 = vmatpush1.msra.mxu0 %v473
        %509 = vmatprep.subr.mxu0 0.0
        %510 = vmatpush1.msra.mxu0 0.0
        %511 = vmatprep.subr.mxu0 0.0
        %512 = vmatpush1.msra.mxu0 0.0
        %513 = vmatprep.subr.mxu0 0.0
        %514 = vmatpush1.msra.mxu0 0.0
        %515 = vmatprep.subr.mxu0 0.0
        %516 = vmatpush1.msra.mxu0 0.0
        %517 = vmatprep.subr.mxu0 0.0
        %518 = vmatpush1.msra.mxu0 0.0
        %519 = vmatprep.subr.mxu0 0.0
        %520 = vmatpush1.msra.mxu0 0.0
        %521 = vmatprep.subr.mxu0 0.0
        %522 = vmatpush1.msra.mxu0 0.0
        %523 = vmatprep.subr.mxu0 0.0
        %524 = vmatpush1.msra.mxu0 0.0
        %525 = vmatprep.subr.mxu0 0.0
        %526 = vmatpush1.msra.mxu0 0.0
        %527 = vmatprep.subr.mxu0 0.0
        %528 = vmatpush1.msra.mxu0 0.0
        %529 = vmatprep.subr.mxu0 0.0
        %530 = vmatpush1.msra.mxu0 0.0
        %531 = vmatprep.subr.mxu0 0.0
        %532 = vmatpush1.msra.mxu0 0.0
        %533 = vmatprep.subr.mxu0 0.0
        %534 = vmatpush1.msra.mxu0 0.0
        %535 = vmatprep.subr.mxu0 0.0
        %536 = vmatpush1.msra.mxu0 0.0
        %537 = vmatprep.subr.mxu0 0.0
        %538 = vmatpush1.msra.mxu0 0.0
        %539 = vmatprep.subr.mxu0 0.0
        %540 = vmatpush1.msra.mxu0 0.0
        %541 = vmatprep.mubr.f32.mxu0 0.0
        %542 = vmatmul.mubr.f32.gmra.mrb[0].mxu0 %v397
        %v543 = vpop.f32.mrb[0].mxu0
        %v544 = vadd.f32 0.0, %v543
        %v545 = vpop.f32.mrb[0].mxu0
        %v546 = vadd.f32 0.0, %v545
        %547 = vmatprep.mubr.f32.mxu0 0.0
        %548 = vmatmul.mubr.f32.gmra.mrb[0].mxu0 %v398
        %v549 = vpop.f32.mrb[0].mxu0
        %v550 = vadd.f32 0.0, %v549
        %v551 = vpop.f32.mrb[0].mxu0
        %v552 = vadd.f32 0.0, %v551
        %553 = vmatprep.mubr.f32.mxu0 0.0
        %554 = vmatmul.mubr.f32.gmra.mrb[0].mxu0 %v399
        %v555 = vpop.f32.mrb[0].mxu0
        %v556 = vadd.f32 0.0, %v555
        %v557 = vpop.f32.mrb[0].mxu0
        %v558 = vadd.f32 0.0, %v557
        %559 = vmatprep.mubr.f32.mxu0 0.0
        %560 = vmatmul.mubr.f32.gmra.mrb[0].mxu0 %v400
        %v561 = vpop.f32.mrb[0].mxu0
        %v562 = vadd.f32 0.0, %v561
        %v563 = vpop.f32.mrb[0].mxu0
        %v564 = vadd.f32 0.0, %v563
        %565 = vmatprep.mubr.f32.mxu0 0.0
        %566 = vmatmul.mubr.f32.gmra.mrb[0].mxu0 %v401
        %v567 = vpop.f32.mrb[0].mxu0
        %v568 = vadd.f32 0.0, %v567
        %v569 = vpop.f32.mrb[0].mxu0
        %v570 = vadd.f32 0.0, %v569
        %571 = vmatprep.mubr.f32.mxu0 0.0
        %572 = vmatmul.mubr.f32.gmra.mrb[0].mxu0 %v402
        %v573 = vpop.f32.mrb[0].mxu0
        %v574 = vadd.f32 0.0, %v573
        %v575 = vpop.f32.mrb[0].mxu0
        %v576 = vadd.f32 0.0, %v575
        %577 = vmatprep.mubr.f32.mxu0 0.0
        %578 = vmatmul.mubr.f32.gmra.mrb[0].mxu0 %v403
        %v579 = vpop.f32.mrb[0].mxu0
        %v580 = vadd.f32 0.0, %v579
        %v581 = vpop.f32.mrb[0].mxu0
        %v582 = vadd.f32 0.0, %v581
        %583 = vmatprep.mubr.f32.mxu0 0.0
        %584 = vmatmul.mubr.f32.gmra.mrb[0].mxu0 %v404
        %v585 = vpop.f32.mrb[0].mxu0
        %v586 = vadd.f32 0.0, %v585
        %v587 = vpop.f32.mrb[0].mxu0
        %v588 = vadd.f32 0.0, %v587
        %589 = vmatprep.mubr.f32.mxu0 0.0
        %590 = vmatmul.mubr.f32.gmra.mrb[0].mxu0 %v405
        %v591 = vpop.f32.mrb[0].mxu0
        %v592 = vadd.f32 0.0, %v591
        %v593 = vpop.f32.mrb[0].mxu0
        %v594 = vadd.f32 0.0, %v593
        %595 = vmatprep.mubr.f32.mxu0 0.0
        %596 = vmatmul.mubr.f32.gmra.mrb[0].mxu0 %v406
        %v597 = vpop.f32.mrb[0].mxu0
        %v598 = vadd.f32 0.0, %v597
        %v599 = vpop.f32.mrb[0].mxu0
        %v600 = vadd.f32 0.0, %v599
        %601 = vmatprep.mubr.f32.mxu0 0.0
        %602 = vmatmul.mubr.f32.gmra.mrb[0].mxu0 %v407
        %v603 = vpop.f32.mrb[0].mxu0
        %v604 = vadd.f32 0.0, %v603
        %v605 = vpop.f32.mrb[0].mxu0
        %v606 = vadd.f32 0.0, %v605
        %607 = vmatprep.mubr.f32.mxu0 0.0
        %608 = vmatmul.mubr.f32.gmra.mrb[0].mxu0 %v408
        %v609 = vpop.f32.mrb[0].mxu0
        %v610 = vadd.f32 0.0, %v609
        %v611 = vpop.f32.mrb[0].mxu0
        %v612 = vadd.f32 0.0, %v611
        %613 = vmatprep.mubr.f32.mxu0 0.0
        %614 = vmatmul.mubr.f32.gmra.mrb[0].mxu0 %v409
        %v615 = vpop.f32.mrb[0].mxu0
        %v616 = vadd.f32 0.0, %v615
        %v617 = vpop.f32.mrb[0].mxu0
        %v618 = vadd.f32 0.0, %v617
        %619 = vmatprep.mubr.f32.mxu0 0.0
        %620 = vmatmul.mubr.f32.gmra.mrb[0].mxu0 %v410
        %v621 = vpop.f32.mrb[0].mxu0
        %v622 = vadd.f32 0.0, %v621
        %v623 = vpop.f32.mrb[0].mxu0
        %v624 = vadd.f32 0.0, %v623
        %625 = vmatprep.mubr.f32.mxu0 0.0
        %626 = vmatmul.mubr.f32.gmra.mrb[0].mxu0 %v411
        %v627 = vpop.f32.mrb[0].mxu0
        %v628 = vadd.f32 0.0, %v627
        %v629 = vpop.f32.mrb[0].mxu0
        %v630 = vadd.f32 0.0, %v629
        %631 = vmatprep.mubr.f32.mxu0 0.0
        %632 = vmatmul.mubr.f32.gmra.mrb[0].mxu0 %v412
        %v633 = vpop.f32.mrb[0].mxu0
        %v634 = vadd.f32 0.0, %v633
        %v635 = vpop.f32.mrb[0].mxu0
        %v636 = vadd.f32 0.0, %v635
        %637 = vdwg.mxu0
        %638 = vmatprep.subr.mxu0 %v416
        %639 = vmatpush1.msra.mxu0 %v415
        %640 = vmatprep.subr.mxu0 %v420
        %641 = vmatpush1.msra.mxu0 %v419
        %642 = vmatprep.subr.mxu0 %v424
        %643 = vmatpush1.msra.mxu0 %v423
        %644 = vmatprep.subr.mxu0 %v428
        %645 = vmatpush1.msra.mxu0 %v427
        %646 = vmatprep.subr.mxu0 %v432
        %647 = vmatpush1.msra.mxu0 %v431
        %648 = vmatprep.subr.mxu0 %v436
        %649 = vmatpush1.msra.mxu0 %v435
        %650 = vmatprep.subr.mxu0 %v440
        %651 = vmatpush1.msra.mxu0 %v439
        %652 = vmatprep.subr.mxu0 %v444
        %653 = vmatpush1.msra.mxu0 %v443
        %654 = vmatprep.subr.mxu0 %v448
        %655 = vmatpush1.msra.mxu0 %v447
        %656 = vmatprep.subr.mxu0 %v452
        %657 = vmatpush1.msra.mxu0 %v451
        %658 = vmatprep.subr.mxu0 %v456
        %659 = vmatpush1.msra.mxu0 %v455
        %660 = vmatprep.subr.mxu0 %v460
        %661 = vmatpush1.msra.mxu0 %v459
        %662 = vmatprep.subr.mxu0 %v464
        %663 = vmatpush1.msra.mxu0 %v463
        %664 = vmatprep.subr.mxu0 %v468
        %665 = vmatpush1.msra.mxu0 %v467
        %666 = vmatprep.subr.mxu0 %v472
        %667 = vmatpush1.msra.mxu0 %v471
        %668 = vmatprep.subr.mxu0 %v476
        %669 = vmatpush1.msra.mxu0 %v475
        %670 = vmatprep.subr.mxu0 0.0
        %671 = vmatpush1.msra.mxu0 0.0
        %672 = vmatprep.subr.mxu0 0.0
        %673 = vmatpush1.msra.mxu0 0.0
        %674 = vmatprep.subr.mxu0 0.0
        %675 = vmatpush1.msra.mxu0 0.0
        %676 = vmatprep.subr.mxu0 0.0
        %677 = vmatpush1.msra.mxu0 0.0
        %678 = vmatprep.subr.mxu0 0.0
        %679 = vmatpush1.msra.mxu0 0.0
        %680 = vmatprep.subr.mxu0 0.0
        %681 = vmatpush1.msra.mxu0 0.0
        %682 = vmatprep.subr.mxu0 0.0
        %683 = vmatpush1.msra.mxu0 0.0
        %684 = vmatprep.subr.mxu0 0.0
        %685 = vmatpush1.msra.mxu0 0.0
        %686 = vmatprep.subr.mxu0 0.0
        %687 = vmatpush1.msra.mxu0 0.0
        %688 = vmatprep.subr.mxu0 0.0
        %689 = vmatpush1.msra.mxu0 0.0
        %690 = vmatprep.subr.mxu0 0.0
        %691 = vmatpush1.msra.mxu0 0.0
        %692 = vmatprep.subr.mxu0 0.0
        %693 = vmatpush1.msra.mxu0 0.0
        %694 = vmatprep.subr.mxu0 0.0
        %695 = vmatpush1.msra.mxu0 0.0
        %696 = vmatprep.subr.mxu0 0.0
        %697 = vmatpush1.msra.mxu0 0.0
        %698 = vmatprep.subr.mxu0 0.0
        %699 = vmatpush1.msra.mxu0 0.0
        %700 = vmatprep.subr.mxu0 0.0
        %701 = vmatpush1.msra.mxu0 0.0
        %702 = vmatprep.mubr.f32.mxu0 0.0
        %703 = vmatmul.mubr.f32.gmra.mrb[0].mxu0 %v397
        %v704 = vpop.f32.mrb[0].mxu0
        %v705 = vadd.f32 0.0, %v704
        %v706 = vpop.f32.mrb[0].mxu0
        %v707 = vadd.f32 0.0, %v706
        %708 = vmatprep.mubr.f32.mxu0 0.0
        %709 = vmatmul.mubr.f32.gmra.mrb[0].mxu0 %v398
        %v710 = vpop.f32.mrb[0].mxu0
        %v711 = vadd.f32 0.0, %v710
        %v712 = vpop.f32.mrb[0].mxu0
        %v713 = vadd.f32 0.0, %v712
        %714 = vmatprep.mubr.f32.mxu0 0.0
        %715 = vmatmul.mubr.f32.gmra.mrb[0].mxu0 %v399
        %v716 = vpop.f32.mrb[0].mxu0
        %v717 = vadd.f32 0.0, %v716
        %v718 = vpop.f32.mrb[0].mxu0
        %v719 = vadd.f32 0.0, %v718
        %720 = vmatprep.mubr.f32.mxu0 0.0
        %721 = vmatmul.mubr.f32.gmra.mrb[0].mxu0 %v400
        %v722 = vpop.f32.mrb[0].mxu0
        %v723 = vadd.f32 0.0, %v722
        %v724 = vpop.f32.mrb[0].mxu0
        %v725 = vadd.f32 0.0, %v724
        %726 = vmatprep.mubr.f32.mxu0 0.0
        %727 = vmatmul.mubr.f32.gmra.mrb[0].mxu0 %v401
        %v728 = vpop.f32.mrb[0].mxu0
        %v729 = vadd.f32 0.0, %v728
        %v730 = vpop.f32.mrb[0].mxu0
        %v731 = vadd.f32 0.0, %v730
        %732 = vmatprep.mubr.f32.mxu0 0.0
        %733 = vmatmul.mubr.f32.gmra.mrb[0].mxu0 %v402
        %v734 = vpop.f32.mrb[0].mxu0
        %v735 = vadd.f32 0.0, %v734
        %v736 = vpop.f32.mrb[0].mxu0
        %v737 = vadd.f32 0.0, %v736
        %738 = vmatprep.mubr.f32.mxu0 0.0
        %739 = vmatmul.mubr.f32.gmra.mrb[0].mxu0 %v403
        %v740 = vpop.f32.mrb[0].mxu0
        %v741 = vadd.f32 0.0, %v740
        %v742 = vpop.f32.mrb[0].mxu0
        %v743 = vadd.f32 0.0, %v742
        %744 = vmatprep.mubr.f32.mxu0 0.0
        %745 = vmatmul.mubr.f32.gmra.mrb[0].mxu0 %v404
        %v746 = vpop.f32.mrb[0].mxu0
        %v747 = vadd.f32 0.0, %v746
        %v748 = vpop.f32.mrb[0].mxu0
        %v749 = vadd.f32 0.0, %v748
        %750 = vmatprep.mubr.f32.mxu0 0.0
        %751 = vmatmul.mubr.f32.gmra.mrb[0].mxu0 %v405
        %v752 = vpop.f32.mrb[0].mxu0
        %v753 = vadd.f32 0.0, %v752
        %v754 = vpop.f32.mrb[0].mxu0
        %v755 = vadd.f32 0.0, %v754
        %756 = vmatprep.mubr.f32.mxu0 0.0
        %757 = vmatmul.mubr.f32.gmra.mrb[0].mxu0 %v406
        %v758 = vpop.f32.mrb[0].mxu0
        %v759 = vadd.f32 0.0, %v758
        %v760 = vpop.f32.mrb[0].mxu0
        %v761 = vadd.f32 0.0, %v760
        %762 = vmatprep.mubr.f32.mxu0 0.0
        %763 = vmatmul.mubr.f32.gmra.mrb[0].mxu0 %v407
        %v764 = vpop.f32.mrb[0].mxu0
        %v765 = vadd.f32 0.0, %v764
        %v766 = vpop.f32.mrb[0].mxu0
        %v767 = vadd.f32 0.0, %v766
        %768 = vmatprep.mubr.f32.mxu0 0.0
        %769 = vmatmul.mubr.f32.gmra.mrb[0].mxu0 %v408
        %v770 = vpop.f32.mrb[0].mxu0
        %v771 = vadd.f32 0.0, %v770
        %v772 = vpop.f32.mrb[0].mxu0
        %v773 = vadd.f32 0.0, %v772
        %774 = vmatprep.mubr.f32.mxu0 0.0
        %775 = vmatmul.mubr.f32.gmra.mrb[0].mxu0 %v409
        %v776 = vpop.f32.mrb[0].mxu0
        %v777 = vadd.f32 0.0, %v776
        %v778 = vpop.f32.mrb[0].mxu0
        %v779 = vadd.f32 0.0, %v778
        %780 = vmatprep.mubr.f32.mxu0 0.0
        %781 = vmatmul.mubr.f32.gmra.mrb[0].mxu0 %v410
        %v782 = vpop.f32.mrb[0].mxu0
        %v783 = vadd.f32 0.0, %v782
        %v784 = vpop.f32.mrb[0].mxu0
        %v785 = vadd.f32 0.0, %v784
        %786 = vmatprep.mubr.f32.mxu0 0.0
        %787 = vmatmul.mubr.f32.gmra.mrb[0].mxu0 %v411
        %v788 = vpop.f32.mrb[0].mxu0
        %v789 = vadd.f32 0.0, %v788
        %v790 = vpop.f32.mrb[0].mxu0
        %v791 = vadd.f32 0.0, %v790
        %792 = vmatprep.mubr.f32.mxu0 0.0
        %793 = vmatmul.mubr.f32.gmra.mrb[0].mxu0 %v412
        %v794 = vpop.f32.mrb[0].mxu0
        %v795 = vadd.f32 0.0, %v794
        %v796 = vpop.f32.mrb[0].mxu0
        %v797 = vadd.f32 0.0, %v796
        %798 = vdwg.mxu0
        %v799 = vadd.f32 %v333, %v544
        %v800 = vadd.f32 %v334, %v546
        %v801 = vadd.f32 %v335, %v705
        %v802 = vadd.f32 %v336, %v707
        %v803 = vadd.f32 %v337, %v550
        %v804 = vadd.f32 %v338, %v552
        %v805 = vadd.f32 %v339, %v711
        %v806 = vadd.f32 %v340, %v713
        %v807 = vadd.f32 %v341, %v556
        %v808 = vadd.f32 %v342, %v558
        %v809 = vadd.f32 %v343, %v717
        %v810 = vadd.f32 %v344, %v719
        %v811 = vadd.f32 %v345, %v562
        %v812 = vadd.f32 %v346, %v564
        %v813 = vadd.f32 %v347, %v723
        %v814 = vadd.f32 %v348, %v725
        %v815 = vadd.f32 %v349, %v568
        %v816 = vadd.f32 %v350, %v570
        %v817 = vadd.f32 %v351, %v729
        %v818 = vadd.f32 %v352, %v731
        %v819 = vadd.f32 %v353, %v574
        %v820 = vadd.f32 %v354, %v576
        %v821 = vadd.f32 %v355, %v735
        %v822 = vadd.f32 %v356, %v737
        %v823 = vadd.f32 %v357, %v580
        %v824 = vadd.f32 %v358, %v582
        %v825 = vadd.f32 %v359, %v741
        %v826 = vadd.f32 %v360, %v743
        %v827 = vadd.f32 %v361, %v586
        %v828 = vadd.f32 %v362, %v588
        %v829 = vadd.f32 %v363, %v747
        %v830 = vadd.f32 %v364, %v749
        %v831 = vadd.f32 %v365, %v592
        %v832 = vadd.f32 %v366, %v594
        %v833 = vadd.f32 %v367, %v753
        %v834 = vadd.f32 %v368, %v755
        %v835 = vadd.f32 %v369, %v598
        %v836 = vadd.f32 %v370, %v600
        %v837 = vadd.f32 %v371, %v759
        %v838 = vadd.f32 %v372, %v761
        %v839 = vadd.f32 %v373, %v604
        %v840 = vadd.f32 %v374, %v606
        %v841 = vadd.f32 %v375, %v765
        %v842 = vadd.f32 %v376, %v767
        %v843 = vadd.f32 %v377, %v610
        %v844 = vadd.f32 %v378, %v612
        %v845 = vadd.f32 %v379, %v771
        %v846 = vadd.f32 %v380, %v773
        %v847 = vadd.f32 %v381, %v616
        %v848 = vadd.f32 %v382, %v618
        %v849 = vadd.f32 %v383, %v777
        %v850 = vadd.f32 %v384, %v779
        %v851 = vadd.f32 %v385, %v622
        %v852 = vadd.f32 %v386, %v624
        %v853 = vadd.f32 %v387, %v783
        %v854 = vadd.f32 %v388, %v785
        %v855 = vadd.f32 %v389, %v628
        %v856 = vadd.f32 %v390, %v630
        %v857 = vadd.f32 %v391, %v789
        %v858 = vadd.f32 %v392, %v791
        %v859 = vadd.f32 %v393, %v634
        %v860 = vadd.f32 %v394, %v636
        %v861 = vadd.f32 %v395, %v795
        %v862 = vadd.f32 %v396, %v797
        %863 = vst [vmem:[#allocation2] sm:$0xff] %v799
        %864 = vst [vmem:[#allocation2 + $0x8] sm:$0xff] %v800
        %865 = vst [vmem:[#allocation2 + $0x10] sm:$0xff] %v801
        %866 = vst [vmem:[#allocation2 + $0x18] sm:$0xff] %v802
        %867 = vst [vmem:[#allocation2 + $0x20] sm:$0xff] %v803
        %868 = vst [vmem:[#allocation2 + $0x28] sm:$0xff] %v804
        %869 = vst [vmem:[#allocation2 + $0x30] sm:$0xff] %v805
        %870 = vst [vmem:[#allocation2 + $0x38] sm:$0xff] %v806
        %871 = vst [vmem:[#allocation2 + $0x40] sm:$0xff] %v807
        %872 = vst [vmem:[#allocation2 + $0x48] sm:$0xff] %v808
        %873 = vst [vmem:[#allocation2 + $0x50] sm:$0xff] %v809
        %874 = vst [vmem:[#allocation2 + $0x58] sm:$0xff] %v810
        %875 = vst [vmem:[#allocation2 + $0x60] sm:$0xff] %v811
        %876 = vst [vmem:[#allocation2 + $0x68] sm:$0xff] %v812
        %877 = vst [vmem:[#allocation2 + $0x70] sm:$0xff] %v813
        %878 = vst [vmem:[#allocation2 + $0x78] sm:$0xff] %v814
        %879 = vst [vmem:[#allocation2 + $0x80] sm:$0xff] %v815
        %880 = vst [vmem:[#allocation2 + $0x88] sm:$0xff] %v816
        %881 = vst [vmem:[#allocation2 + $0x90] sm:$0xff] %v817
        %882 = vst [vmem:[#allocation2 + $0x98] sm:$0xff] %v818
        %883 = vst [vmem:[#allocation2 + $0xa0] sm:$0xff] %v819
        %884 = vst [vmem:[#allocation2 + $0xa8] sm:$0xff] %v820
        %885 = vst [vmem:[#allocation2 + $0xb0] sm:$0xff] %v821
        %886 = vst [vmem:[#allocation2 + $0xb8] sm:$0xff] %v822
        %887 = vst [vmem:[#allocation2 + $0xc0] sm:$0xff] %v823
        %888 = vst [vmem:[#allocation2 + $0xc8] sm:$0xff] %v824
        %889 = vst [vmem:[#allocation2 + $0xd0] sm:$0xff] %v825
        %890 = vst [vmem:[#allocation2 + $0xd8] sm:$0xff] %v826
        %891 = vst [vmem:[#allocation2 + $0xe0] sm:$0xff] %v827
        %892 = vst [vmem:[#allocation2 + $0xe8] sm:$0xff] %v828
        %893 = vst [vmem:[#allocation2 + $0xf0] sm:$0xff] %v829
        %894 = vst [vmem:[#allocation2 + $0xf8] sm:$0xff] %v830
        %895 = vst [vmem:[#allocation2 + $0x100] sm:$0xff] %v831
        %896 = vst [vmem:[#allocation2 + $0x108] sm:$0xff] %v832
        %897 = vst [vmem:[#allocation2 + $0x110] sm:$0xff] %v833
        %898 = vst [vmem:[#allocation2 + $0x118] sm:$0xff] %v834
        %899 = vst [vmem:[#allocation2 + $0x120] sm:$0xff] %v835
        %900 = vst [vmem:[#allocation2 + $0x128] sm:$0xff] %v836
        %901 = vst [vmem:[#allocation2 + $0x130] sm:$0xff] %v837
        %902 = vst [vmem:[#allocation2 + $0x138] sm:$0xff] %v838
        %903 = vst [vmem:[#allocation2 + $0x140] sm:$0xff] %v839
        %904 = vst [vmem:[#allocation2 + $0x148] sm:$0xff] %v840
        %905 = vst [vmem:[#allocation2 + $0x150] sm:$0xff] %v841
        %906 = vst [vmem:[#allocation2 + $0x158] sm:$0xff] %v842
        %907 = vst [vmem:[#allocation2 + $0x160] sm:$0xff] %v843
        %908 = vst [vmem:[#allocation2 + $0x168] sm:$0xff] %v844
        %909 = vst [vmem:[#allocation2 + $0x170] sm:$0xff] %v845
        %910 = vst [vmem:[#allocation2 + $0x178] sm:$0xff] %v846
        %911 = vst [vmem:[#allocation2 + $0x180] sm:$0xff] %v847
        %912 = vst [vmem:[#allocation2 + $0x188] sm:$0xff] %v848
        %913 = vst [vmem:[#allocation2 + $0x190] sm:$0xff] %v849
        %914 = vst [vmem:[#allocation2 + $0x198] sm:$0xff] %v850
        %915 = vst [vmem:[#allocation2 + $0x1a0] sm:$0xff] %v851
        %916 = vst [vmem:[#allocation2 + $0x1a8] sm:$0xff] %v852
        %917 = vst [vmem:[#allocation2 + $0x1b0] sm:$0xff] %v853
        %918 = vst [vmem:[#allocation2 + $0x1b8] sm:$0xff] %v854
        %919 = vst [vmem:[#allocation2 + $0x1c0] sm:$0xff] %v855
        %920 = vst [vmem:[#allocation2 + $0x1c8] sm:$0xff] %v856
        %921 = vst [vmem:[#allocation2 + $0x1d0] sm:$0xff] %v857
        %922 = vst [vmem:[#allocation2 + $0x1d8] sm:$0xff] %v858
        %923 = vst [vmem:[#allocation2 + $0x1e0] sm:$0xff] %v859
        %924 = vst [vmem:[#allocation2 + $0x1e8] sm:$0xff] %v860
        %925 = vst [vmem:[#allocation2 + $0x1f0] sm:$0xff] %v861
        %926 = vst [vmem:[#allocation2 + $0x1f8] sm:$0xff] %v862
        // Predicated region
        $region45: #{tpu_custom_call.1} parent=31 // pred_check
          %p927 = pneg %p265
        $region46: #{tpu_custom_call.1} parent=31 // pred_check_branch
          %929 = sbr.rel (%p927) target = $region48
        $region47: #{tpu_custom_call.1} parent=31 // pred_region
          %v930 = vld [vmem:[#allocation2] sm:$0xff]
          %v931 = vld [vmem:[#allocation2 + $0x8] sm:$0xff]
          %v932 = vld [vmem:[#allocation2 + $0x10] sm:$0xff]
          %v933 = vld [vmem:[#allocation2 + $0x18] sm:$0xff]
          %v934 = vld [vmem:[#allocation2 + $0x20] sm:$0xff]
          %v935 = vld [vmem:[#allocation2 + $0x28] sm:$0xff]
          %v936 = vld [vmem:[#allocation2 + $0x30] sm:$0xff]
          %v937 = vld [vmem:[#allocation2 + $0x38] sm:$0xff]
          %v938 = vld [vmem:[#allocation2 + $0x40] sm:$0xff]
          %v939 = vld [vmem:[#allocation2 + $0x48] sm:$0xff]
          %v940 = vld [vmem:[#allocation2 + $0x50] sm:$0xff]
          %v941 = vld [vmem:[#allocation2 + $0x58] sm:$0xff]
          %v942 = vld [vmem:[#allocation2 + $0x60] sm:$0xff]
          %v943 = vld [vmem:[#allocation2 + $0x68] sm:$0xff]
          %v944 = vld [vmem:[#allocation2 + $0x70] sm:$0xff]
          %v945 = vld [vmem:[#allocation2 + $0x78] sm:$0xff]
          %v946 = vld [vmem:[#allocation2 + $0x80] sm:$0xff]
          %v947 = vld [vmem:[#allocation2 + $0x88] sm:$0xff]
          %v948 = vld [vmem:[#allocation2 + $0x90] sm:$0xff]
          %v949 = vld [vmem:[#allocation2 + $0x98] sm:$0xff]
          %v950 = vld [vmem:[#allocation2 + $0xa0] sm:$0xff]
          %v951 = vld [vmem:[#allocation2 + $0xa8] sm:$0xff]
          %v952 = vld [vmem:[#allocation2 + $0xb0] sm:$0xff]
          %v953 = vld [vmem:[#allocation2 + $0xb8] sm:$0xff]
          %v954 = vld [vmem:[#allocation2 + $0xc0] sm:$0xff]
          %v955 = vld [vmem:[#allocation2 + $0xc8] sm:$0xff]
          %v956 = vld [vmem:[#allocation2 + $0xd0] sm:$0xff]
          %v957 = vld [vmem:[#allocation2 + $0xd8] sm:$0xff]
          %v958 = vld [vmem:[#allocation2 + $0xe0] sm:$0xff]
          %v959 = vld [vmem:[#allocation2 + $0xe8] sm:$0xff]
          %v960 = vld [vmem:[#allocation2 + $0xf0] sm:$0xff]
          %v961 = vld [vmem:[#allocation2 + $0xf8] sm:$0xff]
          %v962 = vld [vmem:[#allocation2 + $0x100] sm:$0xff]
          %v963 = vld [vmem:[#allocation2 + $0x108] sm:$0xff]
          %v964 = vld [vmem:[#allocation2 + $0x110] sm:$0xff]
          %v965 = vld [vmem:[#allocation2 + $0x118] sm:$0xff]
          %v966 = vld [vmem:[#allocation2 + $0x120] sm:$0xff]
          %v967 = vld [vmem:[#allocation2 + $0x128] sm:$0xff]
          %v968 = vld [vmem:[#allocation2 + $0x130] sm:$0xff]
          %v969 = vld [vmem:[#allocation2 + $0x138] sm:$0xff]
          %v970 = vld [vmem:[#allocation2 + $0x140] sm:$0xff]
          %v971 = vld [vmem:[#allocation2 + $0x148] sm:$0xff]
          %v972 = vld [vmem:[#allocation2 + $0x150] sm:$0xff]
          %v973 = vld [vmem:[#allocation2 + $0x158] sm:$0xff]
          %v974 = vld [vmem:[#allocation2 + $0x160] sm:$0xff]
          %v975 = vld [vmem:[#allocation2 + $0x168] sm:$0xff]
          %v976 = vld [vmem:[#allocation2 + $0x170] sm:$0xff]
          %v977 = vld [vmem:[#allocation2 + $0x178] sm:$0xff]
          %v978 = vld [vmem:[#allocation2 + $0x180] sm:$0xff]
          %v979 = vld [vmem:[#allocation2 + $0x188] sm:$0xff]
          %v980 = vld [vmem:[#allocation2 + $0x190] sm:$0xff]
          %v981 = vld [vmem:[#allocation2 + $0x198] sm:$0xff]
          %v982 = vld [vmem:[#allocation2 + $0x1a0] sm:$0xff]
          %v983 = vld [vmem:[#allocation2 + $0x1a8] sm:$0xff]
          %v984 = vld [vmem:[#allocation2 + $0x1b0] sm:$0xff]
          %v985 = vld [vmem:[#allocation2 + $0x1b8] sm:$0xff]
          %v986 = vld [vmem:[#allocation2 + $0x1c0] sm:$0xff]
          %v987 = vld [vmem:[#allocation2 + $0x1c8] sm:$0xff]
          %v988 = vld [vmem:[#allocation2 + $0x1d0] sm:$0xff]
          %v989 = vld [vmem:[#allocation2 + $0x1d8] sm:$0xff]
          %v990 = vld [vmem:[#allocation2 + $0x1e0] sm:$0xff]
          %v991 = vld [vmem:[#allocation2 + $0x1e8] sm:$0xff]
          %v992 = vld [vmem:[#allocation2 + $0x1f0] sm:$0xff]
          %v993 = vld [vmem:[#allocation2 + $0x1f8] sm:$0xff]
          %v994 = vld [vmem:[%s261] sm:$0xf]
          %v996 = vlaneseq
          %v997 = vshrl.u32 %v996, 7
          %v998 = vsub.s32 0, %v997
          %v999 = vrot.slane %v994, %v998
          %v1000 = vlaneseq
          %v1001 = vshrl.u32 %v1000, 7
          %v1002 = vsub.s32 1, %v1001
          %v1003 = vrot.slane %v994, %v1002
          %v1004 = vlaneseq
          %v1005 = vshrl.u32 %v1004, 7
          %v1006 = vsub.s32 2, %v1005
          %v1007 = vrot.slane %v994, %v1006
          %v1008 = vlaneseq
          %v1009 = vshrl.u32 %v1008, 7
          %v1010 = vsub.s32 3, %v1009
          %v1011 = vrot.slane %v994, %v1010
          %v1016 = vadd.f32 %v930, %v999
          %v1017 = vadd.f32 %v931, %v1003
          %v1018 = vadd.f32 %v932, %v1007
          %v1019 = vadd.f32 %v933, %v1011
          %v1020 = vadd.f32 %v934, %v999
          %v1021 = vadd.f32 %v935, %v1003
          %v1022 = vadd.f32 %v936, %v1007
          %v1023 = vadd.f32 %v937, %v1011
          %v1024 = vadd.f32 %v938, %v999
          %v1025 = vadd.f32 %v939, %v1003
          %v1026 = vadd.f32 %v940, %v1007
          %v1027 = vadd.f32 %v941, %v1011
          %v1028 = vadd.f32 %v942, %v999
          %v1029 = vadd.f32 %v943, %v1003
          %v1030 = vadd.f32 %v944, %v1007
          %v1031 = vadd.f32 %v945, %v1011
          %v1032 = vadd.f32 %v946, %v999
          %v1033 = vadd.f32 %v947, %v1003
          %v1034 = vadd.f32 %v948, %v1007
          %v1035 = vadd.f32 %v949, %v1011
          %v1036 = vadd.f32 %v950, %v999
          %v1037 = vadd.f32 %v951, %v1003
          %v1038 = vadd.f32 %v952, %v1007
          %v1039 = vadd.f32 %v953, %v1011
          %v1040 = vadd.f32 %v954, %v999
          %v1041 = vadd.f32 %v955, %v1003
          %v1042 = vadd.f32 %v956, %v1007
          %v1043 = vadd.f32 %v957, %v1011
          %v1044 = vadd.f32 %v958, %v999
          %v1045 = vadd.f32 %v959, %v1003
          %v1046 = vadd.f32 %v960, %v1007
          %v1047 = vadd.f32 %v961, %v1011
          %v1048 = vadd.f32 %v962, %v999
          %v1049 = vadd.f32 %v963, %v1003
          %v1050 = vadd.f32 %v964, %v1007
          %v1051 = vadd.f32 %v965, %v1011
          %v1052 = vadd.f32 %v966, %v999
          %v1053 = vadd.f32 %v967, %v1003
          %v1054 = vadd.f32 %v968, %v1007
          %v1055 = vadd.f32 %v969, %v1011
          %v1056 = vadd.f32 %v970, %v999
          %v1057 = vadd.f32 %v971, %v1003
          %v1058 = vadd.f32 %v972, %v1007
          %v1059 = vadd.f32 %v973, %v1011
          %v1060 = vadd.f32 %v974, %v999
          %v1061 = vadd.f32 %v975, %v1003
          %v1062 = vadd.f32 %v976, %v1007
          %v1063 = vadd.f32 %v977, %v1011
          %v1064 = vadd.f32 %v978, %v999
          %v1065 = vadd.f32 %v979, %v1003
          %v1066 = vadd.f32 %v980, %v1007
          %v1067 = vadd.f32 %v981, %v1011
          %v1068 = vadd.f32 %v982, %v999
          %v1069 = vadd.f32 %v983, %v1003
          %v1070 = vadd.f32 %v984, %v1007
          %v1071 = vadd.f32 %v985, %v1011
          %v1072 = vadd.f32 %v986, %v999
          %v1073 = vadd.f32 %v987, %v1003
          %v1074 = vadd.f32 %v988, %v1007
          %v1075 = vadd.f32 %v989, %v1011
          %v1076 = vadd.f32 %v990, %v999
          %v1077 = vadd.f32 %v991, %v1003
          %v1078 = vadd.f32 %v992, %v1007
          %v1079 = vadd.f32 %v993, %v1011
          %vm1080 = vcmp.ge.f32.partialorder %v1016, 0.0
          %vm1081 = vcmp.ge.f32.partialorder %v1017, 0.0
          %vm1082 = vcmp.ge.f32.partialorder %v1018, 0.0
          %vm1083 = vcmp.ge.f32.partialorder %v1019, 0.0
          %vm1084 = vcmp.ge.f32.partialorder %v1020, 0.0
          %vm1085 = vcmp.ge.f32.partialorder %v1021, 0.0
          %vm1086 = vcmp.ge.f32.partialorder %v1022, 0.0
          %vm1087 = vcmp.ge.f32.partialorder %v1023, 0.0
          %vm1088 = vcmp.ge.f32.partialorder %v1024, 0.0
          %vm1089 = vcmp.ge.f32.partialorder %v1025, 0.0
          %vm1090 = vcmp.ge.f32.partialorder %v1026, 0.0
          %vm1091 = vcmp.ge.f32.partialorder %v1027, 0.0
          %vm1092 = vcmp.ge.f32.partialorder %v1028, 0.0
          %vm1093 = vcmp.ge.f32.partialorder %v1029, 0.0
          %vm1094 = vcmp.ge.f32.partialorder %v1030, 0.0
          %vm1095 = vcmp.ge.f32.partialorder %v1031, 0.0
          %vm1096 = vcmp.ge.f32.partialorder %v1032, 0.0
          %vm1097 = vcmp.ge.f32.partialorder %v1033, 0.0
          %vm1098 = vcmp.ge.f32.partialorder %v1034, 0.0
          %vm1099 = vcmp.ge.f32.partialorder %v1035, 0.0
          %vm1100 = vcmp.ge.f32.partialorder %v1036, 0.0
          %vm1101 = vcmp.ge.f32.partialorder %v1037, 0.0
          %vm1102 = vcmp.ge.f32.partialorder %v1038, 0.0
          %vm1103 = vcmp.ge.f32.partialorder %v1039, 0.0
          %vm1104 = vcmp.ge.f32.partialorder %v1040, 0.0
          %vm1105 = vcmp.ge.f32.partialorder %v1041, 0.0
          %vm1106 = vcmp.ge.f32.partialorder %v1042, 0.0
          %vm1107 = vcmp.ge.f32.partialorder %v1043, 0.0
          %vm1108 = vcmp.ge.f32.partialorder %v1044, 0.0
          %vm1109 = vcmp.ge.f32.partialorder %v1045, 0.0
          %vm1110 = vcmp.ge.f32.partialorder %v1046, 0.0
          %vm1111 = vcmp.ge.f32.partialorder %v1047, 0.0
          %vm1112 = vcmp.ge.f32.partialorder %v1048, 0.0
          %vm1113 = vcmp.ge.f32.partialorder %v1049, 0.0
          %vm1114 = vcmp.ge.f32.partialorder %v1050, 0.0
          %vm1115 = vcmp.ge.f32.partialorder %v1051, 0.0
          %vm1116 = vcmp.ge.f32.partialorder %v1052, 0.0
          %vm1117 = vcmp.ge.f32.partialorder %v1053, 0.0
          %vm1118 = vcmp.ge.f32.partialorder %v1054, 0.0
          %vm1119 = vcmp.ge.f32.partialorder %v1055, 0.0
          %vm1120 = vcmp.ge.f32.partialorder %v1056, 0.0
          %vm1121 = vcmp.ge.f32.partialorder %v1057, 0.0
          %vm1122 = vcmp.ge.f32.partialorder %v1058, 0.0
          %vm1123 = vcmp.ge.f32.partialorder %v1059, 0.0
          %vm1124 = vcmp.ge.f32.partialorder %v1060, 0.0
          %vm1125 = vcmp.ge.f32.partialorder %v1061, 0.0
          %vm1126 = vcmp.ge.f32.partialorder %v1062, 0.0
          %vm1127 = vcmp.ge.f32.partialorder %v1063, 0.0
          %vm1128 = vcmp.ge.f32.partialorder %v1064, 0.0
          %vm1129 = vcmp.ge.f32.partialorder %v1065, 0.0
          %vm1130 = vcmp.ge.f32.partialorder %v1066, 0.0
          %vm1131 = vcmp.ge.f32.partialorder %v1067, 0.0
          %vm1132 = vcmp.ge.f32.partialorder %v1068, 0.0
          %vm1133 = vcmp.ge.f32.partialorder %v1069, 0.0
          %vm1134 = vcmp.ge.f32.partialorder %v1070, 0.0
          %vm1135 = vcmp.ge.f32.partialorder %v1071, 0.0
          %vm1136 = vcmp.ge.f32.partialorder %v1072, 0.0
          %vm1137 = vcmp.ge.f32.partialorder %v1073, 0.0
          %vm1138 = vcmp.ge.f32.partialorder %v1074, 0.0
          %vm1139 = vcmp.ge.f32.partialorder %v1075, 0.0
          %vm1140 = vcmp.ge.f32.partialorder %v1076, 0.0
          %vm1141 = vcmp.ge.f32.partialorder %v1077, 0.0
          %vm1142 = vcmp.ge.f32.partialorder %v1078, 0.0
          %vm1143 = vcmp.ge.f32.partialorder %v1079, 0.0
          %v1144 = vmul.f32 %v1016, 0.2
          %v1145 = vmul.f32 %v1017, 0.2
          %v1146 = vmul.f32 %v1018, 0.2
          %v1147 = vmul.f32 %v1019, 0.2
          %v1148 = vmul.f32 %v1020, 0.2
          %v1149 = vmul.f32 %v1021, 0.2
          %v1150 = vmul.f32 %v1022, 0.2
          %v1151 = vmul.f32 %v1023, 0.2
          %v1152 = vmul.f32 %v1024, 0.2
          %v1153 = vmul.f32 %v1025, 0.2
          %v1154 = vmul.f32 %v1026, 0.2
          %v1155 = vmul.f32 %v1027, 0.2
          %v1156 = vmul.f32 %v1028, 0.2
          %v1157 = vmul.f32 %v1029, 0.2
          %v1158 = vmul.f32 %v1030, 0.2
          %v1159 = vmul.f32 %v1031, 0.2
          %v1160 = vmul.f32 %v1032, 0.2
          %v1161 = vmul.f32 %v1033, 0.2
          %v1162 = vmul.f32 %v1034, 0.2
          %v1163 = vmul.f32 %v1035, 0.2
          %v1164 = vmul.f32 %v1036, 0.2
          %v1165 = vmul.f32 %v1037, 0.2
          %v1166 = vmul.f32 %v1038, 0.2
          %v1167 = vmul.f32 %v1039, 0.2
          %v1168 = vmul.f32 %v1040, 0.2
          %v1169 = vmul.f32 %v1041, 0.2
          %v1170 = vmul.f32 %v1042, 0.2
          %v1171 = vmul.f32 %v1043, 0.2
          %v1172 = vmul.f32 %v1044, 0.2
          %v1173 = vmul.f32 %v1045, 0.2
          %v1174 = vmul.f32 %v1046, 0.2
          %v1175 = vmul.f32 %v1047, 0.2
          %v1176 = vmul.f32 %v1048, 0.2
          %v1177 = vmul.f32 %v1049, 0.2
          %v1178 = vmul.f32 %v1050, 0.2
          %v1179 = vmul.f32 %v1051, 0.2
          %v1180 = vmul.f32 %v1052, 0.2
          %v1181 = vmul.f32 %v1053, 0.2
          %v1182 = vmul.f32 %v1054, 0.2
          %v1183 = vmul.f32 %v1055, 0.2
          %v1184 = vmul.f32 %v1056, 0.2
          %v1185 = vmul.f32 %v1057, 0.2
          %v1186 = vmul.f32 %v1058, 0.2
          %v1187 = vmul.f32 %v1059, 0.2
          %v1188 = vmul.f32 %v1060, 0.2
          %v1189 = vmul.f32 %v1061, 0.2
          %v1190 = vmul.f32 %v1062, 0.2
          %v1191 = vmul.f32 %v1063, 0.2
          %v1192 = vmul.f32 %v1064, 0.2
          %v1193 = vmul.f32 %v1065, 0.2
          %v1194 = vmul.f32 %v1066, 0.2
          %v1195 = vmul.f32 %v1067, 0.2
          %v1196 = vmul.f32 %v1068, 0.2
          %v1197 = vmul.f32 %v1069, 0.2
          %v1198 = vmul.f32 %v1070, 0.2
          %v1199 = vmul.f32 %v1071, 0.2
          %v1200 = vmul.f32 %v1072, 0.2
          %v1201 = vmul.f32 %v1073, 0.2
          %v1202 = vmul.f32 %v1074, 0.2
          %v1203 = vmul.f32 %v1075, 0.2
          %v1204 = vmul.f32 %v1076, 0.2
          %v1205 = vmul.f32 %v1077, 0.2
          %v1206 = vmul.f32 %v1078, 0.2
          %v1207 = vmul.f32 %v1079, 0.2
          %v1208 = vsel %vm1080, %v1016, %v1144
          %v1209 = vsel %vm1081, %v1017, %v1145
          %v1210 = vsel %vm1082, %v1018, %v1146
          %v1211 = vsel %vm1083, %v1019, %v1147
          %v1212 = vsel %vm1084, %v1020, %v1148
          %v1213 = vsel %vm1085, %v1021, %v1149
          %v1214 = vsel %vm1086, %v1022, %v1150
          %v1215 = vsel %vm1087, %v1023, %v1151
          %v1216 = vsel %vm1088, %v1024, %v1152
          %v1217 = vsel %vm1089, %v1025, %v1153
          %v1218 = vsel %vm1090, %v1026, %v1154
          %v1219 = vsel %vm1091, %v1027, %v1155
          %v1220 = vsel %vm1092, %v1028, %v1156
          %v1221 = vsel %vm1093, %v1029, %v1157
          %v1222 = vsel %vm1094, %v1030, %v1158
          %v1223 = vsel %vm1095, %v1031, %v1159
          %v1224 = vsel %vm1096, %v1032, %v1160
          %v1225 = vsel %vm1097, %v1033, %v1161
          %v1226 = vsel %vm1098, %v1034, %v1162
          %v1227 = vsel %vm1099, %v1035, %v1163
          %v1228 = vsel %vm1100, %v1036, %v1164
          %v1229 = vsel %vm1101, %v1037, %v1165
          %v1230 = vsel %vm1102, %v1038, %v1166
          %v1231 = vsel %vm1103, %v1039, %v1167
          %v1232 = vsel %vm1104, %v1040, %v1168
          %v1233 = vsel %vm1105, %v1041, %v1169
          %v1234 = vsel %vm1106, %v1042, %v1170
          %v1235 = vsel %vm1107, %v1043, %v1171
          %v1236 = vsel %vm1108, %v1044, %v1172
          %v1237 = vsel %vm1109, %v1045, %v1173
          %v1238 = vsel %vm1110, %v1046, %v1174
          %v1239 = vsel %vm1111, %v1047, %v1175
          %v1240 = vsel %vm1112, %v1048, %v1176
          %v1241 = vsel %vm1113, %v1049, %v1177
          %v1242 = vsel %vm1114, %v1050, %v1178
          %v1243 = vsel %vm1115, %v1051, %v1179
          %v1244 = vsel %vm1116, %v1052, %v1180
          %v1245 = vsel %vm1117, %v1053, %v1181
          %v1246 = vsel %vm1118, %v1054, %v1182
          %v1247 = vsel %vm1119, %v1055, %v1183
          %v1248 = vsel %vm1120, %v1056, %v1184
          %v1249 = vsel %vm1121, %v1057, %v1185
          %v1250 = vsel %vm1122, %v1058, %v1186
          %v1251 = vsel %vm1123, %v1059, %v1187
          %v1252 = vsel %vm1124, %v1060, %v1188
          %v1253 = vsel %vm1125, %v1061, %v1189
          %v1254 = vsel %vm1126, %v1062, %v1190
          %v1255 = vsel %vm1127, %v1063, %v1191
          %v1256 = vsel %vm1128, %v1064, %v1192
          %v1257 = vsel %vm1129, %v1065, %v1193
          %v1258 = vsel %vm1130, %v1066, %v1194
          %v1259 = vsel %vm1131, %v1067, %v1195
          %v1260 = vsel %vm1132, %v1068, %v1196
          %v1261 = vsel %vm1133, %v1069, %v1197
          %v1262 = vsel %vm1134, %v1070, %v1198
          %v1263 = vsel %vm1135, %v1071, %v1199
          %v1264 = vsel %vm1136, %v1072, %v1200
          %v1265 = vsel %vm1137, %v1073, %v1201
          %v1266 = vsel %vm1138, %v1074, %v1202
          %v1267 = vsel %vm1139, %v1075, %v1203
          %v1268 = vsel %vm1140, %v1076, %v1204
          %v1269 = vsel %vm1141, %v1077, %v1205
          %v1270 = vsel %vm1142, %v1078, %v1206
          %v1271 = vsel %vm1143, %v1079, %v1207
          %v1272 = vmul.f32 %v1208, 1.4142135
          %v1273 = vmul.f32 %v1209, 1.4142135
          %v1274 = vmul.f32 %v1210, 1.4142135
          %v1275 = vmul.f32 %v1211, 1.4142135
          %v1276 = vmul.f32 %v1212, 1.4142135
          %v1277 = vmul.f32 %v1213, 1.4142135
          %v1278 = vmul.f32 %v1214, 1.4142135
          %v1279 = vmul.f32 %v1215, 1.4142135
          %v1280 = vmul.f32 %v1216, 1.4142135
          %v1281 = vmul.f32 %v1217, 1.4142135
          %v1282 = vmul.f32 %v1218, 1.4142135
          %v1283 = vmul.f32 %v1219, 1.4142135
          %v1284 = vmul.f32 %v1220, 1.4142135
          %v1285 = vmul.f32 %v1221, 1.4142135
          %v1286 = vmul.f32 %v1222, 1.4142135
          %v1287 = vmul.f32 %v1223, 1.4142135
          %v1288 = vmul.f32 %v1224, 1.4142135
          %v1289 = vmul.f32 %v1225, 1.4142135
          %v1290 = vmul.f32 %v1226, 1.4142135
          %v1291 = vmul.f32 %v1227, 1.4142135
          %v1292 = vmul.f32 %v1228, 1.4142135
          %v1293 = vmul.f32 %v1229, 1.4142135
          %v1294 = vmul.f32 %v1230, 1.4142135
          %v1295 = vmul.f32 %v1231, 1.4142135
          %v1296 = vmul.f32 %v1232, 1.4142135
          %v1297 = vmul.f32 %v1233, 1.4142135
          %v1298 = vmul.f32 %v1234, 1.4142135
          %v1299 = vmul.f32 %v1235, 1.4142135
          %v1300 = vmul.f32 %v1236, 1.4142135
          %v1301 = vmul.f32 %v1237, 1.4142135
          %v1302 = vmul.f32 %v1238, 1.4142135
          %v1303 = vmul.f32 %v1239, 1.4142135
          %v1304 = vmul.f32 %v1240, 1.4142135
          %v1305 = vmul.f32 %v1241, 1.4142135
          %v1306 = vmul.f32 %v1242, 1.4142135
          %v1307 = vmul.f32 %v1243, 1.4142135
          %v1308 = vmul.f32 %v1244, 1.4142135
          %v1309 = vmul.f32 %v1245, 1.4142135
          %v1310 = vmul.f32 %v1246, 1.4142135
          %v1311 = vmul.f32 %v1247, 1.4142135
          %v1312 = vmul.f32 %v1248, 1.4142135
          %v1313 = vmul.f32 %v1249, 1.4142135
          %v1314 = vmul.f32 %v1250, 1.4142135
          %v1315 = vmul.f32 %v1251, 1.4142135
          %v1316 = vmul.f32 %v1252, 1.4142135
          %v1317 = vmul.f32 %v1253, 1.4142135
          %v1318 = vmul.f32 %v1254, 1.4142135
          %v1319 = vmul.f32 %v1255, 1.4142135
          %v1320 = vmul.f32 %v1256, 1.4142135
          %v1321 = vmul.f32 %v1257, 1.4142135
          %v1322 = vmul.f32 %v1258, 1.4142135
          %v1323 = vmul.f32 %v1259, 1.4142135
          %v1324 = vmul.f32 %v1260, 1.4142135
          %v1325 = vmul.f32 %v1261, 1.4142135
          %v1326 = vmul.f32 %v1262, 1.4142135
          %v1327 = vmul.f32 %v1263, 1.4142135
          %v1328 = vmul.f32 %v1264, 1.4142135
          %v1329 = vmul.f32 %v1265, 1.4142135
          %v1330 = vmul.f32 %v1266, 1.4142135
          %v1331 = vmul.f32 %v1267, 1.4142135
          %v1332 = vmul.f32 %v1268, 1.4142135
          %v1333 = vmul.f32 %v1269, 1.4142135
          %v1334 = vmul.f32 %v1270, 1.4142135
          %v1335 = vmul.f32 %v1271, 1.4142135
          %1336 = vst [vmem:[%s254] sm:$0xff] %v1272
          %1337 = vst [vmem:[%s254 + $0x8] sm:$0xff] %v1273
          %1338 = vst [vmem:[%s254 + $0x10] sm:$0xff] %v1274
          %1339 = vst [vmem:[%s254 + $0x18] sm:$0xff] %v1275
          %1340 = vst [vmem:[%s254 + $0x20] sm:$0xff] %v1276
          %1341 = vst [vmem:[%s254 + $0x28] sm:$0xff] %v1277
          %1342 = vst [vmem:[%s254 + $0x30] sm:$0xff] %v1278
          %1343 = vst [vmem:[%s254 + $0x38] sm:$0xff] %v1279
          %1344 = vst [vmem:[%s254 + $0x40] sm:$0xff] %v1280
          %1345 = vst [vmem:[%s254 + $0x48] sm:$0xff] %v1281
          %1346 = vst [vmem:[%s254 + $0x50] sm:$0xff] %v1282
          %1347 = vst [vmem:[%s254 + $0x58] sm:$0xff] %v1283
          %1348 = vst [vmem:[%s254 + $0x60] sm:$0xff] %v1284
          %1349 = vst [vmem:[%s254 + $0x68] sm:$0xff] %v1285
          %1350 = vst [vmem:[%s254 + $0x70] sm:$0xff] %v1286
          %1351 = vst [vmem:[%s254 + $0x78] sm:$0xff] %v1287
          %1352 = vst [vmem:[%s254 + $0x80] sm:$0xff] %v1288
          %1353 = vst [vmem:[%s254 + $0x88] sm:$0xff] %v1289
          %1354 = vst [vmem:[%s254 + $0x90] sm:$0xff] %v1290
          %1355 = vst [vmem:[%s254 + $0x98] sm:$0xff] %v1291
          %1356 = vst [vmem:[%s254 + $0xa0] sm:$0xff] %v1292
          %1357 = vst [vmem:[%s254 + $0xa8] sm:$0xff] %v1293
          %1358 = vst [vmem:[%s254 + $0xb0] sm:$0xff] %v1294
          %1359 = vst [vmem:[%s254 + $0xb8] sm:$0xff] %v1295
          %1360 = vst [vmem:[%s254 + $0xc0] sm:$0xff] %v1296
          %1361 = vst [vmem:[%s254 + $0xc8] sm:$0xff] %v1297
          %1362 = vst [vmem:[%s254 + $0xd0] sm:$0xff] %v1298
          %1363 = vst [vmem:[%s254 + $0xd8] sm:$0xff] %v1299
          %1364 = vst [vmem:[%s254 + $0xe0] sm:$0xff] %v1300
          %1365 = vst [vmem:[%s254 + $0xe8] sm:$0xff] %v1301
          %1366 = vst [vmem:[%s254 + $0xf0] sm:$0xff] %v1302
          %1367 = vst [vmem:[%s254 + $0xf8] sm:$0xff] %v1303
          %1368 = vst [vmem:[%s254 + $0x100] sm:$0xff] %v1304
          %1369 = vst [vmem:[%s254 + $0x108] sm:$0xff] %v1305
          %1370 = vst [vmem:[%s254 + $0x110] sm:$0xff] %v1306
          %1371 = vst [vmem:[%s254 + $0x118] sm:$0xff] %v1307
          %1372 = vst [vmem:[%s254 + $0x120] sm:$0xff] %v1308
          %1373 = vst [vmem:[%s254 + $0x128] sm:$0xff] %v1309
          %1374 = vst [vmem:[%s254 + $0x130] sm:$0xff] %v1310
          %1375 = vst [vmem:[%s254 + $0x138] sm:$0xff] %v1311
          %1376 = vst [vmem:[%s254 + $0x140] sm:$0xff] %v1312
          %1377 = vst [vmem:[%s254 + $0x148] sm:$0xff] %v1313
          %1378 = vst [vmem:[%s254 + $0x150] sm:$0xff] %v1314
          %1379 = vst [vmem:[%s254 + $0x158] sm:$0xff] %v1315
          %1380 = vst [vmem:[%s254 + $0x160] sm:$0xff] %v1316
          %1381 = vst [vmem:[%s254 + $0x168] sm:$0xff] %v1317
          %1382 = vst [vmem:[%s254 + $0x170] sm:$0xff] %v1318
          %1383 = vst [vmem:[%s254 + $0x178] sm:$0xff] %v1319
          %1384 = vst [vmem:[%s254 + $0x180] sm:$0xff] %v1320
          %1385 = vst [vmem:[%s254 + $0x188] sm:$0xff] %v1321
          %1386 = vst [vmem:[%s254 + $0x190] sm:$0xff] %v1322
          %1387 = vst [vmem:[%s254 + $0x198] sm:$0xff] %v1323
          %1388 = vst [vmem:[%s254 + $0x1a0] sm:$0xff] %v1324
          %1389 = vst [vmem:[%s254 + $0x1a8] sm:$0xff] %v1325
          %1390 = vst [vmem:[%s254 + $0x1b0] sm:$0xff] %v1326
          %1391 = vst [vmem:[%s254 + $0x1b8] sm:$0xff] %v1327
          %1392 = vst [vmem:[%s254 + $0x1c0] sm:$0xff] %v1328
          %1393 = vst [vmem:[%s254 + $0x1c8] sm:$0xff] %v1329
          %1394 = vst [vmem:[%s254 + $0x1d0] sm:$0xff] %v1330
          %1395 = vst [vmem:[%s254 + $0x1d8] sm:$0xff] %v1331
          %1396 = vst [vmem:[%s254 + $0x1e0] sm:$0xff] %v1332
          %1397 = vst [vmem:[%s254 + $0x1e8] sm:$0xff] %v1333
          %1398 = vst [vmem:[%s254 + $0x1f0] sm:$0xff] %v1334
          %1399 = vst [vmem:[%s254 + $0x1f8] sm:$0xff] %v1335
        $region48: #{tpu_custom_call.1} parent=31 // pred_fallthru
          _
        %s1400 = sand.u32 %s132, 1
        %s1401 = scalar_lea.sflag [#allocation5], %s1400
        %s1402 = sand.u32 %s132, 1
        %s1403 = smul.addr %s1402, 512
        %s1404 = scalar_lea.vmem [#allocation8], %s1403
        // Predicated region
        $region49: #{tpu_custom_call.1} parent=31 // pred_check
          %p1405 = pneg %p142
        $region50: #{tpu_custom_call.1} parent=31 // pred_check_branch
          %1407 = sbr.rel (%p1405) target = $region52
        $region51: #{tpu_custom_call.1} parent=31 // pred_region
          %s1408 = smul.u32 16, %s26
          %s1409 = smul.u32 4, %s27
          %s1411 = ssub.s32 8192, 8192
          %1412 = vsyncadd %s1401, %s1411
          %s1413 = smul.addr %s1408, 4
          %s1414 = sadd.s32 %s1409, %s1413
          %s1415 = smul.addr %s1414, 128
          %s1416 = scalar_lea.hbm %s3, %s1415
          %s1417 = sshll.u32 %s1404, 4
          %s1418 = int_to_ptr.vmem [resolvable:$true] %s1417
          %1423 = dma.vmem_to_hbm [thread:$0]  %s1418, 8192, %s1416, %s1401, 512, 512, 32
        $region52: #{tpu_custom_call.1} parent=31 // pred_fallthru
          _
      $region32: #{tpu_custom_call.1} parent=5 // pred_fallthru
        _
      %p1424 = scmp.le.s32.totalorder 2, %s16
      // Predicated region
      $region53: #{tpu_custom_call.1} parent=5 // pred_check
        %p1425 = pneg %p1424
      $region54: #{tpu_custom_call.1} parent=5 // pred_check_branch
        %1427 = sbr.rel (%p1425) target = $region56
      $region55: #{tpu_custom_call.1} parent=5 // pred_region
        %s1428 = ssub.s32 %s16, 2
        // Predicated region
        $region57: #{tpu_custom_call.1} parent=55 // pred_check
          %p1429 = pneg %p148
        $region58: #{tpu_custom_call.1} parent=55 // pred_check_branch
          %1431 = sbr.rel (%p1429) target = $region60
        $region59: #{tpu_custom_call.1} parent=55 // pred_region
          %s1432 = sand.u32 %s133, 1
          %s1433 = scalar_lea.sflag [#allocation5], %s1432
          %s1434 = sand.u32 %s133, 1
          %s1435 = smul.addr %s1434, 512
          %s1436 = scalar_lea.vmem [#allocation8], %s1435
          %1437 = dma.done %s1433, 8192
        $region60: #{tpu_custom_call.1} parent=55 // pred_fallthru
          _
      $region56: #{tpu_custom_call.1} parent=5 // pred_fallthru
        _
    $region6: #{tpu_custom_call.1} parent=1 // loop_footer
      %s20 = sadd.s32 1, %s16
    $region7: #{tpu_custom_call.1} parent=1 // loop_footer_branch
      %15 = sbr.rel target = $region3
    $region8: #{tpu_custom_call.1} parent=1 // loop_exit
      _
    %1438 = vsyncpa [#allocation4], 1
    %s1439 = scalar_lea.sflag [#allocation4], 1
    %1440 = vsyncpa %s1439, 1
    %1441 = vsyncpa [#allocation7], 1
    %1442 = vsyncpa [#allocation5], 1
    %s1443 = scalar_lea.sflag [#allocation5], 1
    %1444 = vsyncpa %s1443, 1

</llo_original>
